<compile_context>
chip_gen: v7x
topology: tpu7x:2x2x1
jax: 0.10.0
libtpu: 0.0.40
codegen_flags: <defaults>
</compile_context>

<pallas_src>
import functools

import jax
import jax.numpy as jnp
from jax import lax
from jax.experimental import pallas as pl
from jax.experimental.pallas import tpu as pltpu

EXPANSION = 4
BN_EPS = 1e-5
LANE = 128


def _round_up(x, m):
    return (x + m - 1) // m * m


def _fold_bn(gamma, beta, mean, var):
    scale = gamma / jnp.sqrt(var + BN_EPS)
    return scale, beta - mean * scale          # 1-D scale, 1-D bias


# --------------------------------------------------------------------------
# trace-time capability / budget probes (cached)
# --------------------------------------------------------------------------
def _probe_kernel(x_ref, o_ref):
    o_ref[...] = x_ref[...] + 1.0


@functools.lru_cache(maxsize=None)
def _single_buffer_ok():
    """True iff this Pallas build accepts pipeline_mode=pl.Buffered(1)."""
    try:
        fn = pl.pallas_call(
            _probe_kernel,
            out_shape=jax.ShapeDtypeStruct((16, 128), jnp.float32),
            grid=(2,),
            in_specs=[pl.BlockSpec((8, 128), lambda i: (0, 0),
                                   pipeline_mode=pl.Buffered(1))],
            out_specs=pl.BlockSpec((8, 128), lambda i: (i, 0)),
        )
        jax.jit(fn).lower(jax.ShapeDtypeStruct((8, 128), jnp.float32)).compile()
        return True
    except Exception:
        return False


@functools.lru_cache(maxsize=None)
def _vmem_budget_bytes():
    """Per-core VMEM budget; generation-aware with a conservative fallback."""
    try:
        cap = int(pltpu.get_tpu_info().vmem_capacity_bytes)
    except Exception:
        cap = 64 << 20                      # v7x-sized conservative fallback
    return max(min(cap * 3 // 4, 96 << 20), 24 << 20)


# --------------------------------------------------------------------------
# VMEM estimate + tiling choice
# --------------------------------------------------------------------------
def _vmem_bytes(nb, th_out, stride, Hp, Wp2, Wo, Cin_p, P_p, Cout_p,
                has_ds, wbuf):
    th_in = (th_out - 1) * stride + 3
    F, B = 4, 2
    img = 2 * nb * Hp * Wp2 * Cin_p * B           # double-buffered bf16 image
    msk = wbuf * Hp * Wp2 * LANE * B              # lane-padded border mask
    outb = 2 * nb * th_out * Wo * Cout_p * F      # double-buffered f32 out tile
    wgt = (Cin_p * P_p + 9 * P_p * P_p + P_p * Cout_p) * B + 2 * P_p * F + Cout_p * F
    if has_ds:
        wgt += Cin_p * Cout_p * B + Cout_p * F
    wgt *= wbuf
    m1 = nb * th_in * Wp2
    m2 = nb * th_out * Wo
    inter = (m1 * P_p * (F + B)                   # conv1 out (f32) + bf16 y1
             + 3 * nb * th_in * Wo * P_p * B      # W-decimated columns (bf16)
             + m2 * 3 * P_p * B                   # one im2col tap (bf16)
             + m2 * P_p * (F + B)                 # conv2 accumulator + bf16 y2
             + 2 * m2 * Cout_p * F)               # conv3 out + shortcut
    return img + msk + outb + wgt + inter


def _choose_tiling(N, Ho, Wo, est, budget, max_rows):
    cap = max(1, min(Ho, 64 if max_rows is None else max_rows))
    fitting = [t for t in range(cap, 0, -1) if est(1, t) <= budget]
    if not fitting:
        th_out = 1
    else:
        t_max = fitting[0]
        th_out = t_max                    # padded last tile if no good divisor
        for t in fitting:
            if Ho % t == 0 and 2 * t >= t_max:
                th_out = t                # prefer a divisor (no wasted rows)
                break
    n_tiles = -(-Ho // th_out)
    # fold batch elements into one grid step when the spatial M is small
    nb = 1
    if n_tiles == 1:
        while (nb < N and N % (2 * nb) == 0 and nb * th_out * Wo < 256
               and est(2 * nb, th_out) <= budget):
            nb *= 2
    return th_out, n_tiles, nb


# --------------------------------------------------------------------------
# kernel
# --------------------------------------------------------------------------
def _bottleneck_kernel(x_ref, m_ref, w1_ref, b1_ref, w2_ref, b2_ref,
                       w3_ref, b3_ref, *rest,
                       Wo, stride, th_out, th_in, nb, has_downsample):
    if has_downsample:
        ws_ref, bs_ref, o_ref = rest
    else:
        (o_ref,) = rest

    _, _, Wp2, Cin_p = x_ref.shape
    P_p = w1_ref.shape[1]
    Cout_p = w3_ref.shape[1]

    t = pl.program_id(1)
    rows_per_tile = th_out * stride
    row_start = pl.multiple_of(t * rows_per_tile, rows_per_tile)

    # halo window of the zero-padded bf16 image for this (batch-fold, row) tile
    xw = x_ref[:, pl.ds(row_start, th_in), :, :]          # (nb, th_in, Wp2, Cin_p)
    # {0,1} border-validity mask slice (replaces the old iota/compare/select)
    mvalid = m_ref[pl.ds(row_start, th_in), :, :].astype(jnp.float32)

    m1 = nb * th_in * Wp2
    m2 = nb * th_out * Wo

    # ---- conv1 (1x1, BN scale folded) + bias + ReLU, border zeroed, bf16 ----
    y1 = jnp.dot(xw.reshape(m1, Cin_p), w1_ref[...],
                 preferred_element_type=jnp.float32)
    y1 = jnp.maximum(y1 + b1_ref[...], 0.0).reshape(nb, th_in, Wp2, P_p)
    y1 = (y1 * mvalid).astype(jnp.bfloat16)

    # ---- conv2 (3x3, stride): 3 dots of K = 3*P, im2col assembled in bf16 ---
    w_len = (Wo - 1) * stride + 1
    h_len = (th_out - 1) * stride + 1
    # decimate along W once per dw offset; reused across the 3 dh taps
    cols = [lax.slice(y1, (0, 0, dw, 0), (nb, th_in, dw + w_len, P_p),
                      (1, 1, stride, 1)) for dw in range(3)]
    y2 = b2_ref[...]                                       # f32 accumulator init
    for dh in range(3):
        tap = jnp.concatenate(
            [lax.slice(cols[dw], (0, dh, 0, 0), (nb, dh + h_len, Wo, P_p),
                       (1, stride, 1, 1)) for dw in range(3)],
            axis=-1).reshape(m2, 3 * P_p)
        y2 = y2 + jnp.dot(tap, w2_ref[dh], preferred_element_type=jnp.float32)
    y2 = jnp.maximum(y2, 0.0).astype(jnp.bfloat16)

    # ---- conv3 (1x1) + bias --------------------------------------------------
    y3 = jnp.dot(y2, w3_ref[...], preferred_element_type=jnp.float32) + b3_ref[...]

    # ---- shortcut --------------------------------------------------------------
    if has_downsample:
        xs = lax.slice(xw, (0, 1, 1, 0), (nb, 1 + h_len, 1 + w_len, Cin_p),
                       (1, stride, stride, 1)).reshape(m2, Cin_p)
        sc = (jnp.dot(xs, ws_ref[...], preferred_element_type=jnp.float32)
              + bs_ref[...])
    else:
        # identity shortcut: bf16 stream -> f32 upcast, no matmul
        sc = xw[:, 1:1 + th_out, 1:1 + Wo, :Cout_p].astype(jnp.float32)
        sc = sc.reshape(m2, Cout_p)

    # ---- residual add + ReLU (lane-dense f32 store) ----------------------------
    o_ref[...] = jnp.maximum(y3 + sc, 0.0).reshape(nb, th_out, Wo, Cout_p)


# --------------------------------------------------------------------------
# one-time parameter preparation (hoisted out of the per-call path)
# --------------------------------------------------------------------------
def prepare_bottleneck_params(params, stride):
    """Fold eval-mode BN into conv weights, pad channels to 128 lanes, cast
    matmul weights to bf16.  Runs once per block, not per forward call."""
    Cin, P = params["w1"].shape
    Cout = EXPANSION * P
    has_downsample = (stride != 1) or (Cin != Cout)
    Cin_p = _round_up(Cin, LANE)
    P_p = _round_up(P, LANE)
    Cout_p = _round_up(Cout, LANE)

    s1, b1 = _fold_bn(params["bn1_g"], params["bn1_b"], params["bn1_m"], params["bn1_v"])
    s2, b2 = _fold_bn(params["bn2_g"], params["bn2_b"], params["bn2_m"], params["bn2_v"])
    s3, b3 = _fold_bn(params["bn3_g"], params["bn3_b"], params["bn3_m"], params["bn3_v"])

    prep = {
        "w1": (jnp.zeros((Cin_p, P_p), jnp.float32)
               .at[:Cin, :P].set(params["w1"] * s1[None, :]).astype(jnp.bfloat16)),
        "b1": jnp.zeros((1, P_p), jnp.float32).at[0, :P].set(b1),
        "w2": (jnp.zeros((3, 3, P_p, P_p), jnp.float32)
               .at[:, :, :P, :P].set(params["w2"] * s2[None, None, None, :])
               .reshape(3, 3 * P_p, P_p).astype(jnp.bfloat16)),
        "b2": jnp.zeros((1, P_p), jnp.float32).at[0, :P].set(b2),
        "w3": (jnp.zeros((P_p, Cout_p), jnp.float32)
               .at[:P, :Cout].set(params["w3"] * s3[None, :]).astype(jnp.bfloat16)),
        "b3": jnp.zeros((1, Cout_p), jnp.float32).at[0, :Cout].set(b3),
    }
    if has_downsample:
        ss, bs = _fold_bn(params["bns_g"], params["bns_b"],
                          params["bns_m"], params["bns_v"])
        prep["ws"] = (jnp.zeros((Cin_p, Cout_p), jnp.float32)
                      .at[:Cin, :Cout].set(params["ws"] * ss[None, :])
                      .astype(jnp.bfloat16))
        prep["bs"] = jnp.zeros((1, Cout_p), jnp.float32).at[0, :Cout].set(bs)
    return prep


# --------------------------------------------------------------------------
# forward (NHWC end-to-end)
# --------------------------------------------------------------------------
@functools.partial(jax.jit, static_argnums=(2, 3, 4))
def bottleneck_forward_nhwc(x_nhwc, prep, planes, stride, max_row_tile=None):
    """One Bottleneck block: NHWC f32 in -> NHWC f32 out (eval-mode BN)."""
    N, H, W, Cin = x_nhwc.shape
    Cout = EXPANSION * planes
    Ho = (H - 1) // stride + 1
    Wo = (W - 1) // stride + 1
    has_downsample = "ws" in prep

    Cin_p = prep["w1"].shape[0]
    P_p = prep["w1"].shape[1]
    Cout_p = prep["w3"].shape[1]
    assert Cin_p == _round_up(Cin, LANE), "prep/input channel mismatch"
    Wp2 = _round_up(W + 2, 8)

    wbuf = 1 if _single_buffer_ok() else 2
    budget = _vmem_budget_bytes()

    def est(nb_, th_):
        return _vmem_bytes(nb_, th_, stride, H + 2 + stride, Wp2, Wo,
                           Cin_p, P_p, Cout_p, has_downsample, wbuf)

    th_out, n_tiles, nb = _choose_tiling(N, Ho, Wo, est, budget - (2 << 20),
                                         max_row_tile)
    th_in = (th_out - 1) * stride + 3
    Hp = max(H + 2, (n_tiles - 1) * th_out * stride + th_in)
    Ho_pad = n_tiles * th_out

    # activations streamed as bf16; zero pad = conv2 halo + alignment + channels
    x_pad = jnp.pad(x_nhwc.astype(jnp.bfloat16),
                    ((0, 0), (1, Hp - H - 1), (1, Wp2 - W - 1), (0, Cin_p - Cin)))
    # precomputed {0,1} border-validity mask (valid image = rows/cols 1..H/1..W)
    mask = jnp.zeros((Hp, Wp2, 1), jnp.bfloat16).at[1:H + 1, 1:W + 1, :].set(1.0)

    def wspec(shape):
        # grid-invariant block: single-buffer it when the build allows
        idx = lambda n, t: (0,) * len(shape)
        if wbuf == 1:
            return pl.BlockSpec(shape, idx, pipeline_mode=pl.Buffered(1))
        return pl.BlockSpec(shape, idx)

    in_specs = [
        # whole padded image of nb batch elements stays VMEM-resident across
        # the inner row-tile axis (block index depends only on n)
        pl.BlockSpec((nb, Hp, Wp2, Cin_p), lambda n, t: (n, 0, 0, 0)),
        wspec((Hp, Wp2, 1)),
        wspec((Cin_p, P_p)), wspec((1, P_p)),
        wspec((3, 3 * P_p, P_p)), wspec((1, P_p)),
        wspec((P_p, Cout_p)), wspec((1, Cout_p)),
    ]
    args = [x_pad, mask, prep["w1"], prep["b1"], prep["w2"], prep["b2"],
            prep["w3"], prep["b3"]]
    if has_downsample:
        in_specs += [wspec((Cin_p, Cout_p)), wspec((1, Cout_p))]
        args += [prep["ws"], prep["bs"]]

    kernel = functools.partial(
        _bottleneck_kernel, Wo=Wo, stride=stride, th_out=th_out, th_in=th_in,
        nb=nb, has_downsample=has_downsample)

    out = pl.pallas_call(
        kernel,
        out_shape=jax.ShapeDtypeStruct((N, Ho_pad, Wo, Cout_p), jnp.float32),
        grid_spec=pltpu.PrefetchScalarGridSpec(
            num_scalar_prefetch=0,
            grid=(N // nb, n_tiles),
            in_specs=in_specs,
            out_specs=pl.BlockSpec((nb, th_out, Wo, Cout_p),
                                   lambda n, t: (n, t, 0, 0)),
        ),
        compiler_params=pltpu.CompilerParams(
            dimension_semantics=("parallel", "parallel"),
            vmem_limit_bytes=budget),
    )(*args)

    return out[:, :Ho, :, :Cout]


# -------------------- reference (plain JAX, f32, NHWC convs) --------------------
def _ref_forward(x_nchw, params, stride):
    x = jnp.transpose(x_nchw, (0, 2, 3, 1))
    dn = ("NHWC", "HWIO", "NHWC")
    Cin = x.shape[-1]
    P = params["w1"].shape[1]
    Cout = EXPANSION * P

    def conv(v, w_hwio, s, pad):
        return lax.conv_general_dilated(v, w_hwio, (s, s), pad,
                                        dimension_numbers=dn)

    s1, b1 = _fold_bn(params["bn1_g"], params["bn1_b"], params["bn1_m"], params["bn1_v"])
    s2, b2 = _fold_bn(params["bn2_g"], params["bn2_b"], params["bn2_m"], params["bn2_v"])
    s3, b3 = _fold_bn(params["bn3_g"], params["bn3_b"], params["bn3_m"], params["bn3_v"])

    y = conv(x, params["w1"].reshape(1, 1, Cin, P), 1, "VALID") * s1 + b1
    y = jnp.maximum(y, 0.0)
    y = conv(y, params["w2"], stride, [(1, 1), (1, 1)]) * s2 + b2
    y = jnp.maximum(y, 0.0)
    y = conv(y, params["w3"].reshape(1, 1, P, Cout), 1, "VALID") * s3 + b3

    if stride != 1 or Cin != Cout:
        ss, bs = _fold_bn(params["bns_g"], params["bns_b"],
                          params["bns_m"], params["bns_v"])
        sc = conv(x, params["ws"].reshape(1, 1, Cin, Cout), stride, "VALID") * ss + bs
    else:
        sc = x
    out = jnp.maximum(y + sc, 0.0)
    return jnp.transpose(out, (0, 3, 1, 2))


def _make_params(key, in_planes, planes):
    cout = EXPANSION * planes
    ks = jax.random.split(key, 20)
    u = lambda k, n: jax.random.uniform(k, (n,), jnp.float32, 0.5, 1.5)
    nrm = lambda k, shape: 0.1 * jax.random.normal(k, shape, jnp.float32)
    return {
        "w1": nrm(ks[0], (in_planes, planes)),          # 1x1 conv as (Cin, Cout)
        "w2": nrm(ks[1], (3, 3, planes, planes)),       # HWIO
        "w3": nrm(ks[2], (planes, cout)),
        "ws": nrm(ks[3], (in_planes, cout)),
        "bn1_g": u(ks[4], planes),  "bn1_b": nrm(ks[5], (planes,)),
        "bn1_m": nrm(ks[6], (planes,)), "bn1_v": u(ks[7], planes),
        "bn2_g": u(ks[8], planes),  "bn2_b": nrm(ks[9], (planes,)),
        "bn2_m": nrm(ks[10], (planes,)), "bn2_v": u(ks[11], planes),
        "bn3_g": u(ks[12], cout),   "bn3_b": nrm(ks[13], (cout,)),
        "bn3_m": nrm(ks[14], (cout,)), "bn3_v": u(ks[15], cout),
        "bns_g": u(ks[16], cout),   "bns_b": nrm(ks[17], (cout,)),
        "bns_m": nrm(ks[18], (cout,)), "bns_v": u(ks[19], cout),
    }


if __name__ == "__main__":
    key = jax.random.PRNGKey(0)
    N = 2

    # (in_planes, planes, stride, H, max_row_tile)
    #  cfg0: projection shortcut, forced 2 row tiles per image (halo windows)
    #  cfg1: identity shortcut, whole-image tile
    #  cfg2: projection shortcut, small spatial -> batch-folded grid step (nb=2)
    #  cfg3: identity shortcut, small spatial -> batch-folded grid step (nb=2)
    configs = [
        (4, 4, 1, 16, 8),
        (16, 4, 1, 16, None),
        (4, 4, 1, 8, None),
        (16, 4, 1, 8, None),
    ]

    for in_planes, planes, stride, H, max_rows in configs:
        kx, kp, key = jax.random.split(key, 3)
        x = jax.random.normal(kx, (N, in_planes, H, H), jnp.float32)
        params = _make_params(kp, in_planes, planes)

        # one-time weight prep (BN fold + padding + bf16) outside the hot path
        prep = prepare_bottleneck_params(params, stride)

        # the kernel is NHWC end-to-end; NCHW transposes only at the PyTorch
        # interface boundary for comparison with the reference
        x_nhwc = jnp.transpose(x, (0, 2, 3, 1))
        out_nhwc = bottleneck_forward_nhwc(x_nhwc, prep, planes, stride, max_rows)
        out = jax.block_until_ready(jnp.transpose(out_nhwc, (0, 3, 1, 2)))
        ref = jax.block_until_ready(_ref_forward(x, params, stride))

        Ho = (H - 1) // stride + 1
        assert out.shape == (N, EXPANSION * planes, Ho, Ho), out.shape
        err = float(jnp.max(jnp.abs(out - ref)))
        # bf16 matmuls + bf16 activation streaming vs f32 reference
        assert jnp.allclose(out, ref, rtol=5e-2, atol=6e-2), (
            in_planes, planes, stride, H, err)

    print("KERNEL_OK")
</pallas_src>

<mosaic_0001>
module attributes {stable_mosaic.version = 11 : i64} {
  func.func @_bottleneck_kernel(%arg0: i32, %arg1: i32, %arg2: memref<1x18x24x128xbf16, #tpu.memory_space<vmem>>, %arg3: memref<18x24x1xbf16, #tpu.memory_space<vmem>>, %arg4: memref<128x128xbf16, #tpu.memory_space<vmem>>, %arg5: memref<1x128xf32, #tpu.memory_space<vmem>>, %arg6: memref<3x384x128xbf16, #tpu.memory_space<vmem>>, %arg7: memref<1x128xf32, #tpu.memory_space<vmem>>, %arg8: memref<128x128xbf16, #tpu.memory_space<vmem>>, %arg9: memref<1x128xf32, #tpu.memory_space<vmem>>, %arg10: memref<128x128xbf16, #tpu.memory_space<vmem>>, %arg11: memref<1x128xf32, #tpu.memory_space<vmem>>, %arg12: memref<1x8x16x128xf32, #tpu.memory_space<vmem>>) attributes {dimension_semantics = [#tpu.dimension_semantics<parallel>, #tpu.dimension_semantics<parallel>], iteration_bounds = array<i64: 2, 2>, scalar_prefetch = 0 : i64, scratch_operands = 0 : i64, tpu.core_type = #tpu.core_type<tc>, window_params = [{transform_indices = @transform_0, window_bounds = array<i64: 1, 18, 24, 128>}, {pipeline_mode = #tpu.pipeline_mode<synchronous>, transform_indices = @transform_1, window_bounds = array<i64: 18, 24, 1>}, {pipeline_mode = #tpu.pipeline_mode<synchronous>, transform_indices = @transform_2, window_bounds = array<i64: 128, 128>}, {pipeline_mode = #tpu.pipeline_mode<synchronous>, transform_indices = @transform_3, window_bounds = array<i64: 1, 128>}, {pipeline_mode = #tpu.pipeline_mode<synchronous>, transform_indices = @transform_4, window_bounds = array<i64: 3, 384, 128>}, {pipeline_mode = #tpu.pipeline_mode<synchronous>, transform_indices = @transform_5, window_bounds = array<i64: 1, 128>}, {pipeline_mode = #tpu.pipeline_mode<synchronous>, transform_indices = @transform_6, window_bounds = array<i64: 128, 128>}, {pipeline_mode = #tpu.pipeline_mode<synchronous>, transform_indices = @transform_7, window_bounds = array<i64: 1, 128>}, {pipeline_mode = #tpu.pipeline_mode<synchronous>, transform_indices = @transform_8, window_bounds = array<i64: 128, 128>}, {pipeline_mode = #tpu.pipeline_mode<synchronous>, transform_indices = @transform_9, window_bounds = array<i64: 1, 128>}, {transform_indices = @transform_10, window_bounds = array<i64: 1, 8, 16, 128>}]} {
    %c8_i32 = arith.constant 8 : i32
    %0 = arith.muli %arg1, %c8_i32 : i32
    %1 = tpu.assume_multiple %0, 8 : i32
    %c0 = arith.constant 0 : index
    %2 = arith.index_cast %1 : i32 to index
    %c0_0 = arith.constant 0 : index
    %c0_1 = arith.constant 0 : index
    %3 = vector.load %arg2[%c0, %2, %c0_0, %c0_1] : memref<1x18x24x128xbf16, #tpu.memory_space<vmem>>, vector<1x10x24x128xbf16>
    %4 = arith.index_cast %1 : i32 to index
    %c0_2 = arith.constant 0 : index
    %c0_3 = arith.constant 0 : index
    %5 = vector.load %arg3[%4, %c0_2, %c0_3] : memref<18x24x1xbf16, #tpu.memory_space<vmem>>, vector<10x24x1xbf16>
    %6 = arith.extf %5 : vector<10x24x1xbf16> to vector<10x24x1xf32>
    %7 = vector.shape_cast %3 : vector<1x10x24x128xbf16> to vector<240x128xbf16>
    %c0_4 = arith.constant 0 : index
    %c0_5 = arith.constant 0 : index
    %8 = vector.load %arg4[%c0_4, %c0_5] : memref<128x128xbf16, #tpu.memory_space<vmem>>, vector<128x128xbf16>
    %cst = arith.constant dense<0.000000e+00> : vector<240x128xf32>
    %9 = tpu.matmul %7, %8, %cst {dimension_numbers = #tpu.dot_dimension_numbers<[1], [0], [0], [1], [0, 0, 1, 1], [], []>} : vector<240x128xbf16>, vector<128x128xbf16>, vector<240x128xf32> -> vector<240x128xf32>
    %c0_6 = arith.constant 0 : index
    %c0_7 = arith.constant 0 : index
    %10 = vector.load %arg5[%c0_6, %c0_7] : memref<1x128xf32, #tpu.memory_space<vmem>>, vector<1x128xf32>
    %11 = vector.broadcast %10 : vector<1x128xf32> to vector<240x128xf32>
    %12 = arith.addf %9, %11 : vector<240x128xf32>
    %cst_8 = arith.constant 0.000000e+00 : f32
    %13 = vector.broadcast %cst_8 : f32 to vector<240x128xf32>
    %14 = arith.maximumf %12, %13 : vector<240x128xf32>
    %15 = vector.shape_cast %14 : vector<240x128xf32> to vector<1x10x24x128xf32>
    %16 = vector.shape_cast %6 : vector<10x24x1xf32> to vector<1x10x24x1xf32>
    %17 = vector.broadcast %16 : vector<1x10x24x1xf32> to vector<1x10x24x128xf32>
    %18 = arith.mulf %15, %17 : vector<1x10x24x128xf32>
    %19 = arith.truncf %18 : vector<1x10x24x128xf32> to vector<1x10x24x128xbf16>
    %20 = vector.extract_strided_slice %19 {offsets = [0, 0, 0, 0], sizes = [1, 10, 16, 128], strides = [1, 1, 1, 1]} : vector<1x10x24x128xbf16> to vector<1x10x16x128xbf16>
    %21 = vector.extract_strided_slice %19 {offsets = [0, 0, 1, 0], sizes = [1, 10, 16, 128], strides = [1, 1, 1, 1]} : vector<1x10x24x128xbf16> to vector<1x10x16x128xbf16>
    %22 = vector.extract_strided_slice %19 {offsets = [0, 0, 2, 0], sizes = [1, 10, 16, 128], strides = [1, 1, 1, 1]} : vector<1x10x24x128xbf16> to vector<1x10x16x128xbf16>
    %c0_9 = arith.constant 0 : index
    %c0_10 = arith.constant 0 : index
    %23 = vector.load %arg7[%c0_9, %c0_10] : memref<1x128xf32, #tpu.memory_space<vmem>>, vector<1x128xf32>
    %24 = vector.extract_strided_slice %20 {offsets = [0, 0, 0, 0], sizes = [1, 8, 16, 128], strides = [1, 1, 1, 1]} : vector<1x10x16x128xbf16> to vector<1x8x16x128xbf16>
    %25 = vector.extract_strided_slice %21 {offsets = [0, 0, 0, 0], sizes = [1, 8, 16, 128], strides = [1, 1, 1, 1]} : vector<1x10x16x128xbf16> to vector<1x8x16x128xbf16>
    %26 = vector.extract_strided_slice %22 {offsets = [0, 0, 0, 0], sizes = [1, 8, 16, 128], strides = [1, 1, 1, 1]} : vector<1x10x16x128xbf16> to vector<1x8x16x128xbf16>
    %27 = tpu.concatenate %24, %25, %26 in 3 : vector<1x8x16x128xbf16>, vector<1x8x16x128xbf16>, vector<1x8x16x128xbf16> -> vector<1x8x16x384xbf16>
    %28 = vector.shape_cast %27 : vector<1x8x16x384xbf16> to vector<128x384xbf16>
    %c0_11 = arith.constant 0 : index
    %c0_12 = arith.constant 0 : index
    %c0_13 = arith.constant 0 : index
    %29 = vector.load %arg6[%c0_11, %c0_12, %c0_13] : memref<3x384x128xbf16, #tpu.memory_space<vmem>>, vector<1x384x128xbf16>
    %30 = vector.shape_cast %29 : vector<1x384x128xbf16> to vector<384x128xbf16>
    %cst_14 = arith.constant dense<0.000000e+00> : vector<128x128xf32>
    %31 = tpu.matmul %28, %30, %cst_14 {dimension_numbers = #tpu.dot_dimension_numbers<[1], [0], [0], [1], [0, 0, 1, 1], [], []>} : vector<128x384xbf16>, vector<384x128xbf16>, vector<128x128xf32> -> vector<128x128xf32>
    %32 = vector.broadcast %23 : vector<1x128xf32> to vector<128x128xf32>
    %33 = arith.addf %32, %31 : vector<128x128xf32>
    %34 = vector.extract_strided_slice %20 {offsets = [0, 1, 0, 0], sizes = [1, 8, 16, 128], strides = [1, 1, 1, 1]} : vector<1x10x16x128xbf16> to vector<1x8x16x128xbf16>
    %35 = vector.extract_strided_slice %21 {offsets = [0, 1, 0, 0], sizes = [1, 8, 16, 128], strides = [1, 1, 1, 1]} : vector<1x10x16x128xbf16> to vector<1x8x16x128xbf16>
    %36 = vector.extract_strided_slice %22 {offsets = [0, 1, 0, 0], sizes = [1, 8, 16, 128], strides = [1, 1, 1, 1]} : vector<1x10x16x128xbf16> to vector<1x8x16x128xbf16>
    %37 = tpu.concatenate %34, %35, %36 in 3 : vector<1x8x16x128xbf16>, vector<1x8x16x128xbf16>, vector<1x8x16x128xbf16> -> vector<1x8x16x384xbf16>
    %38 = vector.shape_cast %37 : vector<1x8x16x384xbf16> to vector<128x384xbf16>
    %c1 = arith.constant 1 : index
    %c0_15 = arith.constant 0 : index
    %c0_16 = arith.constant 0 : index
    %39 = vector.load %arg6[%c1, %c0_15, %c0_16] : memref<3x384x128xbf16, #tpu.memory_space<vmem>>, vector<1x384x128xbf16>
    %40 = vector.shape_cast %39 : vector<1x384x128xbf16> to vector<384x128xbf16>
    %cst_17 = arith.constant dense<0.000000e+00> : vector<128x128xf32>
    %41 = tpu.matmul %38, %40, %cst_17 {dimension_numbers = #tpu.dot_dimension_numbers<[1], [0], [0], [1], [0, 0, 1, 1], [], []>} : vector<128x384xbf16>, vector<384x128xbf16>, vector<128x128xf32> -> vector<128x128xf32>
    %42 = arith.addf %33, %41 : vector<128x128xf32>
    %43 = vector.extract_strided_slice %20 {offsets = [0, 2, 0, 0], sizes = [1, 8, 16, 128], strides = [1, 1, 1, 1]} : vector<1x10x16x128xbf16> to vector<1x8x16x128xbf16>
    %44 = vector.extract_strided_slice %21 {offsets = [0, 2, 0, 0], sizes = [1, 8, 16, 128], strides = [1, 1, 1, 1]} : vector<1x10x16x128xbf16> to vector<1x8x16x128xbf16>
    %45 = vector.extract_strided_slice %22 {offsets = [0, 2, 0, 0], sizes = [1, 8, 16, 128], strides = [1, 1, 1, 1]} : vector<1x10x16x128xbf16> to vector<1x8x16x128xbf16>
    %46 = tpu.concatenate %43, %44, %45 in 3 : vector<1x8x16x128xbf16>, vector<1x8x16x128xbf16>, vector<1x8x16x128xbf16> -> vector<1x8x16x384xbf16>
    %47 = vector.shape_cast %46 : vector<1x8x16x384xbf16> to vector<128x384xbf16>
    %c2 = arith.constant 2 : index
    %c0_18 = arith.constant 0 : index
    %c0_19 = arith.constant 0 : index
    %48 = vector.load %arg6[%c2, %c0_18, %c0_19] : memref<3x384x128xbf16, #tpu.memory_space<vmem>>, vector<1x384x128xbf16>
    %49 = vector.shape_cast %48 : vector<1x384x128xbf16> to vector<384x128xbf16>
    %cst_20 = arith.constant dense<0.000000e+00> : vector<128x128xf32>
    %50 = tpu.matmul %47, %49, %cst_20 {dimension_numbers = #tpu.dot_dimension_numbers<[1], [0], [0], [1], [0, 0, 1, 1], [], []>} : vector<128x384xbf16>, vector<384x128xbf16>, vector<128x128xf32> -> vector<128x128xf32>
    %51 = arith.addf %42, %50 : vector<128x128xf32>
    %cst_21 = arith.constant 0.000000e+00 : f32
    %52 = vector.broadcast %cst_21 : f32 to vector<128x128xf32>
    %53 = arith.maximumf %51, %52 : vector<128x128xf32>
    %54 = arith.truncf %53 : vector<128x128xf32> to vector<128x128xbf16>
    %c0_22 = arith.constant 0 : index
    %c0_23 = arith.constant 0 : index
    %55 = vector.load %arg8[%c0_22, %c0_23] : memref<128x128xbf16, #tpu.memory_space<vmem>>, vector<128x128xbf16>
    %cst_24 = arith.constant dense<0.000000e+00> : vector<128x128xf32>
    %56 = tpu.matmul %54, %55, %cst_24 {dimension_numbers = #tpu.dot_dimension_numbers<[1], [0], [0], [1], [0, 0, 1, 1], [], []>} : vector<128x128xbf16>, vector<128x128xbf16>, vector<128x128xf32> -> vector<128x128xf32>
    %c0_25 = arith.constant 0 : index
    %c0_26 = arith.constant 0 : index
    %57 = vector.load %arg9[%c0_25, %c0_26] : memref<1x128xf32, #tpu.memory_space<vmem>>, vector<1x128xf32>
    %58 = vector.broadcast %57 : vector<1x128xf32> to vector<128x128xf32>
    %59 = arith.addf %56, %58 : vector<128x128xf32>
    %60 = vector.extract_strided_slice %3 {offsets = [0, 1, 1, 0], sizes = [1, 8, 16, 128], strides = [1, 1, 1, 1]} : vector<1x10x24x128xbf16> to vector<1x8x16x128xbf16>
    %61 = vector.shape_cast %60 : vector<1x8x16x128xbf16> to vector<128x128xbf16>
    %c0_27 = arith.constant 0 : index
    %c0_28 = arith.constant 0 : index
    %62 = vector.load %arg10[%c0_27, %c0_28] : memref<128x128xbf16, #tpu.memory_space<vmem>>, vector<128x128xbf16>
    %cst_29 = arith.constant dense<0.000000e+00> : vector<128x128xf32>
    %63 = tpu.matmul %61, %62, %cst_29 {dimension_numbers = #tpu.dot_dimension_numbers<[1], [0], [0], [1], [0, 0, 1, 1], [], []>} : vector<128x128xbf16>, vector<128x128xbf16>, vector<128x128xf32> -> vector<128x128xf32>
    %c0_30 = arith.constant 0 : index
    %c0_31 = arith.constant 0 : index
    %64 = vector.load %arg11[%c0_30, %c0_31] : memref<1x128xf32, #tpu.memory_space<vmem>>, vector<1x128xf32>
    %65 = vector.broadcast %64 : vector<1x128xf32> to vector<128x128xf32>
    %66 = arith.addf %63, %65 : vector<128x128xf32>
    %67 = arith.addf %59, %66 : vector<128x128xf32>
    %cst_32 = arith.constant 0.000000e+00 : f32
    %68 = vector.broadcast %cst_32 : f32 to vector<128x128xf32>
    %69 = arith.maximumf %67, %68 : vector<128x128xf32>
    %70 = vector.shape_cast %69 : vector<128x128xf32> to vector<1x8x16x128xf32>
    %c0_33 = arith.constant 0 : index
    %c0_34 = arith.constant 0 : index
    %c0_35 = arith.constant 0 : index
    %c0_36 = arith.constant 0 : index
    %71 = vector.load %arg12[%c0_33, %c0_34, %c0_35, %c0_36] : memref<1x8x16x128xf32, #tpu.memory_space<vmem>>, vector<1x8x16x128xf32>
    tpu.vector_store %arg12[%c0_33, %c0_34, %c0_35, %c0_36], %70 {strides = array<i32>} : memref<1x8x16x128xf32, #tpu.memory_space<vmem>>, vector<1x8x16x128xf32>,
    return
  }
  func.func @transform_0(%arg0: i32, %arg1: i32) -> (i32, i32, i32, i32) {
    %c0_i32 = arith.constant 0 : i32
    %c0_i32_0 = arith.constant 0 : i32
    %c0_i32_1 = arith.constant 0 : i32
    %c0_i32_2 = arith.constant 0 : i32
    return %arg0, %c0_i32, %c0_i32_0, %c0_i32_1 : i32, i32, i32, i32
  }
  func.func @transform_1(%arg0: i32, %arg1: i32) -> (i32, i32, i32) {
    %c0_i32 = arith.constant 0 : i32
    %c0_i32_0 = arith.constant 0 : i32
    %c0_i32_1 = arith.constant 0 : i32
    %c0_i32_2 = arith.constant 0 : i32
    return %c0_i32, %c0_i32_0, %c0_i32_1 : i32, i32, i32
  }
  func.func @transform_2(%arg0: i32, %arg1: i32) -> (i32, i32) {
    %c0_i32 = arith.constant 0 : i32
    %c0_i32_0 = arith.constant 0 : i32
    %c0_i32_1 = arith.constant 0 : i32
    return %c0_i32, %c0_i32_0 : i32, i32
  }
  func.func @transform_3(%arg0: i32, %arg1: i32) -> (i32, i32) {
    %c0_i32 = arith.constant 0 : i32
    %c0_i32_0 = arith.constant 0 : i32
    %c0_i32_1 = arith.constant 0 : i32
    return %c0_i32, %c0_i32_0 : i32, i32
  }
  func.func @transform_4(%arg0: i32, %arg1: i32) -> (i32, i32, i32) {
    %c0_i32 = arith.constant 0 : i32
    %c0_i32_0 = arith.constant 0 : i32
    %c0_i32_1 = arith.constant 0 : i32
    %c0_i32_2 = arith.constant 0 : i32
    return %c0_i32, %c0_i32_0, %c0_i32_1 : i32, i32, i32
  }
  func.func @transform_5(%arg0: i32, %arg1: i32) -> (i32, i32) {
    %c0_i32 = arith.constant 0 : i32
    %c0_i32_0 = arith.constant 0 : i32
    %c0_i32_1 = arith.constant 0 : i32
    return %c0_i32, %c0_i32_0 : i32, i32
  }
  func.func @transform_6(%arg0: i32, %arg1: i32) -> (i32, i32) {
    %c0_i32 = arith.constant 0 : i32
    %c0_i32_0 = arith.constant 0 : i32
    %c0_i32_1 = arith.constant 0 : i32
    return %c0_i32, %c0_i32_0 : i32, i32
  }
  func.func @transform_7(%arg0: i32, %arg1: i32) -> (i32, i32) {
    %c0_i32 = arith.constant 0 : i32
    %c0_i32_0 = arith.constant 0 : i32
    %c0_i32_1 = arith.constant 0 : i32
    return %c0_i32, %c0_i32_0 : i32, i32
  }
  func.func @transform_8(%arg0: i32, %arg1: i32) -> (i32, i32) {
    %c0_i32 = arith.constant 0 : i32
    %c0_i32_0 = arith.constant 0 : i32
    %c0_i32_1 = arith.constant 0 : i32
    return %c0_i32, %c0_i32_0 : i32, i32
  }
  func.func @transform_9(%arg0: i32, %arg1: i32) -> (i32, i32) {
    %c0_i32 = arith.constant 0 : i32
    %c0_i32_0 = arith.constant 0 : i32
    %c0_i32_1 = arith.constant 0 : i32
    return %c0_i32, %c0_i32_0 : i32, i32
  }
  func.func @transform_10(%arg0: i32, %arg1: i32) -> (i32, i32, i32, i32) {
    %c0_i32 = arith.constant 0 : i32
    %c0_i32_0 = arith.constant 0 : i32
    %c0_i32_1 = arith.constant 0 : i32
    return %arg0, %arg1, %c0_i32, %c0_i32_0 : i32, i32, i32, i32
  }
}

</mosaic_0001>

<llo_original>
// kernel: bottleneck_forward_nhwc.1
$region0: #{bottleneck_forward_nhwc.1}
  #allocation0 [shape = 'u32[]', space=smem, size = 0x4, offset = 0x4, fixed_abs, tag = 'smem constant byte address 0x4 - core index']
  #allocation1 [shape = 'u32[144,128]{1,0:T(1,128)}', space=vmem, size = 0x12000, scoped, tag = 'internal scratch']
  %s0 = inlined_call_operand.vmem [shape: bf16[2,18,24,128], index: 0, kind: input, shape index: {}]
  %s1 = inlined_call_operand.vmem [shape: bf16[18,24,1], index: 1, kind: input, shape index: {}]
  %s2 = inlined_call_operand.vmem [shape: bf16[128,128], index: 2, kind: input, shape index: {}]
  %s3 = inlined_call_operand.vmem [shape: f32[1,128], index: 3, kind: input, shape index: {}]
  %s4 = inlined_call_operand.vmem [shape: bf16[3,384,128], index: 4, kind: input, shape index: {}]
  %s5 = inlined_call_operand.vmem [shape: f32[1,128], index: 5, kind: input, shape index: {}]
  %s6 = inlined_call_operand.vmem [shape: bf16[128,128], index: 6, kind: input, shape index: {}]
  %s7 = inlined_call_operand.vmem [shape: f32[1,128], index: 7, kind: input, shape index: {}]
  %s8 = inlined_call_operand.vmem [shape: bf16[128,128], index: 8, kind: input, shape index: {}]
  %s9 = inlined_call_operand.vmem [shape: f32[1,128], index: 9, kind: input, shape index: {}]
  %s10 = inlined_call_operand.hbm [shape: f32[2,16,16,128], index: 10, kind: output, shape index: {}]
  %s11 = sld [smem:[#allocation0]]
  $region73: #{bottleneck_forward_nhwc.1} parent=0
    _
  %s13 = ssub.s32 1, %s11
  %s14 = scalar_select 0, %s13, %s11
  $region1: #{bottleneck_forward_nhwc.1} parent=0
    #allocation2 [shape = 'u8[131072]{0}', space=vmem, size = 0x20000, scoped, tag = 'output window, operand 0']
    #allocation3 [shape = 's32[2]{0}', space=sflag, size = 0x8, scoped, tag = 'scoped memory for bottleneck_forward_nhwc.1']
    %15 = vsyncpa [#allocation3], 0
    %s16 = scalar_lea.sflag [#allocation3], 1
    %17 = vsyncpa %s16, 0
    loop: start=0, step=1, limit=6
    $region2: #{bottleneck_forward_nhwc.1} parent=1 // loop_pre_header
      _
    $region3: #{bottleneck_forward_nhwc.1} parent=1 // loop_header
      %s19 = sphi 0, %s23
      %p20 = scmp.ge.s32.totalorder %s19, 6
      %s26 = sphi 0, %s38
      %s27 = sphi 0, %s34
      %s28 = sphi 0, %s26
      %s29 = sphi 0, %s27
      %s30 = sphi 0, %s28
      %s31 = sphi 0, %s29
      %s41 = sphi 0, %s43
      %s44 = sphi 0, %s41
      %s45 = sphi 0, %s44
      %s61 = sphi 0, %s45
      %s65 = sphi 0, %s65
      %s67 = sphi 0, %s65
      %s68 = sphi 0, %s67
      %s82 = sphi 0, %s68
      %s86 = sphi 0, %s86
      %s88 = sphi 0, %s86
      %s89 = sphi 0, %s88
      %s103 = sphi 0, %s89
      %s107 = sphi 0, %s107
      %s109 = sphi 0, %s107
      %s110 = sphi 0, %s109
      %s124 = sphi 0, %s110
      %s128 = sphi 0, %s128
      %s130 = sphi 0, %s128
      %s131 = sphi 0, %s130
      %s145 = sphi 0, %s131
      %s149 = sphi 0, %s149
      %s151 = sphi 0, %s149
      %s152 = sphi 0, %s151
      %s166 = sphi 0, %s152
      %s170 = sphi 0, %s170
      %s172 = sphi 0, %s170
      %s173 = sphi 0, %s172
      %s187 = sphi 0, %s173
      %s191 = sphi 0, %s191
      %s193 = sphi 0, %s191
      %s194 = sphi 0, %s193
      %s208 = sphi 0, %s194
      %s212 = sphi 0, %s212
      %s214 = sphi 0, %s212
      %s215 = sphi 0, %s214
      %s229 = sphi 0, %s215
      %s233 = sphi 0, %s233
      %s235 = sphi 0, %s233
      %s236 = sphi 0, %s235
      %s250 = sphi 0, %s236
      %s258 = sphi 0, %s260
      %s261 = sphi 0, %s258
      %s262 = sphi 0, %s261
      %s278 = sphi 0, %s262
    $region4: #{bottleneck_forward_nhwc.1} parent=1 // loop_header_branch
      %22 = sbr.rel (%p20) target = $region8
    $region5: #{bottleneck_forward_nhwc.1} parent=1 // loop_body
      %s24 = ssub.s32 %s19, 1
      %s25 = ssub.s32 %s19, 2
      %s32 = sadd.s32 1, %s27
      %p33 = scmp.ge.s32.totalorder %s32, 2
      %s34 = scalar_select %p33, 0, %s32
      %s35 = sadd.s32 1, %s26
      %s36 = scalar_select %p33, %s35, %s26
      %p37 = scmp.ge.s32.totalorder %s36, 2
      %s38 = scalar_select %p37, 0, %s36
      %s39 = ssub.s32 %s26, %s38
      %p40 = scmp.eq.s32.totalorder %s39, 0
      %s42 = sadd.s32 %s41, 1
      %s43 = scalar_select %p40, %s41, %s42
      %p46 = pneg %p40
      %p47 = scmp.eq.s32.totalorder %s19, 3
      %p48 = por %p46, %p47
      %p49 = scmp.ne.s32.totalorder %s41, %s44
      %p50 = scmp.eq.s32.totalorder %s19, 0
      %p51 = por %p49, %p50
      %p52 = scmp.ne.s32.totalorder %s41, %s44
      %p53 = scmp.eq.s32.totalorder %s24, 3
      %p54 = por %p52, %p53
      %p55 = scmp.ne.s32.totalorder %s44, %s45
      %p56 = scmp.eq.s32.totalorder %s24, 0
      %p57 = por %p55, %p56
      %p58 = scmp.ne.s32.totalorder %s44, %s45
      %p59 = scmp.eq.s32.totalorder %s25, 3
      %p60 = por %p58, %p59
      %p62 = scmp.ne.s32.totalorder %s45, %s61
      %p63 = scmp.eq.s32.totalorder %s25, 0
      %p64 = por %p62, %p63
      %s66 = sadd.s32 %s65, 1
      %p69 = scmp.eq.s32.totalorder %s19, 3
      %p70 = scmp.ne.s32.totalorder %s65, %s67
      %p71 = scmp.eq.s32.totalorder %s19, 0
      %p72 = por %p70, %p71
      %p73 = scmp.ne.s32.totalorder %s65, %s67
      %p74 = scmp.eq.s32.totalorder %s24, 3
      %p75 = por %p73, %p74
      %p76 = scmp.ne.s32.totalorder %s67, %s68
      %p77 = scmp.eq.s32.totalorder %s24, 0
      %p78 = por %p76, %p77
      %p79 = scmp.ne.s32.totalorder %s67, %s68
      %p80 = scmp.eq.s32.totalorder %s25, 3
      %p81 = por %p79, %p80
      %p83 = scmp.ne.s32.totalorder %s68, %s82
      %p84 = scmp.eq.s32.totalorder %s25, 0
      %p85 = por %p83, %p84
      %s87 = sadd.s32 %s86, 1
      %p90 = scmp.eq.s32.totalorder %s19, 3
      %p91 = scmp.ne.s32.totalorder %s86, %s88
      %p92 = scmp.eq.s32.totalorder %s19, 0
      %p93 = por %p91, %p92
      %p94 = scmp.ne.s32.totalorder %s86, %s88
      %p95 = scmp.eq.s32.totalorder %s24, 3
      %p96 = por %p94, %p95
      %p97 = scmp.ne.s32.totalorder %s88, %s89
      %p98 = scmp.eq.s32.totalorder %s24, 0
      %p99 = por %p97, %p98
      %p100 = scmp.ne.s32.totalorder %s88, %s89
      %p101 = scmp.eq.s32.totalorder %s25, 3
      %p102 = por %p100, %p101
      %p104 = scmp.ne.s32.totalorder %s89, %s103
      %p105 = scmp.eq.s32.totalorder %s25, 0
      %p106 = por %p104, %p105
      %s108 = sadd.s32 %s107, 1
      %p111 = scmp.eq.s32.totalorder %s19, 3
      %p112 = scmp.ne.s32.totalorder %s107, %s109
      %p113 = scmp.eq.s32.totalorder %s19, 0
      %p114 = por %p112, %p113
      %p115 = scmp.ne.s32.totalorder %s107, %s109
      %p116 = scmp.eq.s32.totalorder %s24, 3
      %p117 = por %p115, %p116
      %p118 = scmp.ne.s32.totalorder %s109, %s110
      %p119 = scmp.eq.s32.totalorder %s24, 0
      %p120 = por %p118, %p119
      %p121 = scmp.ne.s32.totalorder %s109, %s110
      %p122 = scmp.eq.s32.totalorder %s25, 3
      %p123 = por %p121, %p122
      %p125 = scmp.ne.s32.totalorder %s110, %s124
      %p126 = scmp.eq.s32.totalorder %s25, 0
      %p127 = por %p125, %p126
      %s129 = sadd.s32 %s128, 1
      %p132 = scmp.eq.s32.totalorder %s19, 3
      %p133 = scmp.ne.s32.totalorder %s128, %s130
      %p134 = scmp.eq.s32.totalorder %s19, 0
      %p135 = por %p133, %p134
      %p136 = scmp.ne.s32.totalorder %s128, %s130
      %p137 = scmp.eq.s32.totalorder %s24, 3
      %p138 = por %p136, %p137
      %p139 = scmp.ne.s32.totalorder %s130, %s131
      %p140 = scmp.eq.s32.totalorder %s24, 0
      %p141 = por %p139, %p140
      %p142 = scmp.ne.s32.totalorder %s130, %s131
      %p143 = scmp.eq.s32.totalorder %s25, 3
      %p144 = por %p142, %p143
      %p146 = scmp.ne.s32.totalorder %s131, %s145
      %p147 = scmp.eq.s32.totalorder %s25, 0
      %p148 = por %p146, %p147
      %s150 = sadd.s32 %s149, 1
      %p153 = scmp.eq.s32.totalorder %s19, 3
      %p154 = scmp.ne.s32.totalorder %s149, %s151
      %p155 = scmp.eq.s32.totalorder %s19, 0
      %p156 = por %p154, %p155
      %p157 = scmp.ne.s32.totalorder %s149, %s151
      %p158 = scmp.eq.s32.totalorder %s24, 3
      %p159 = por %p157, %p158
      %p160 = scmp.ne.s32.totalorder %s151, %s152
      %p161 = scmp.eq.s32.totalorder %s24, 0
      %p162 = por %p160, %p161
      %p163 = scmp.ne.s32.totalorder %s151, %s152
      %p164 = scmp.eq.s32.totalorder %s25, 3
      %p165 = por %p163, %p164
      %p167 = scmp.ne.s32.totalorder %s152, %s166
      %p168 = scmp.eq.s32.totalorder %s25, 0
      %p169 = por %p167, %p168
      %s171 = sadd.s32 %s170, 1
      %p174 = scmp.eq.s32.totalorder %s19, 3
      %p175 = scmp.ne.s32.totalorder %s170, %s172
      %p176 = scmp.eq.s32.totalorder %s19, 0
      %p177 = por %p175, %p176
      %p178 = scmp.ne.s32.totalorder %s170, %s172
      %p179 = scmp.eq.s32.totalorder %s24, 3
      %p180 = por %p178, %p179
      %p181 = scmp.ne.s32.totalorder %s172, %s173
      %p182 = scmp.eq.s32.totalorder %s24, 0
      %p183 = por %p181, %p182
      %p184 = scmp.ne.s32.totalorder %s172, %s173
      %p185 = scmp.eq.s32.totalorder %s25, 3
      %p186 = por %p184, %p185
      %p188 = scmp.ne.s32.totalorder %s173, %s187
      %p189 = scmp.eq.s32.totalorder %s25, 0
      %p190 = por %p188, %p189
      %s192 = sadd.s32 %s191, 1
      %p195 = scmp.eq.s32.totalorder %s19, 3
      %p196 = scmp.ne.s32.totalorder %s191, %s193
      %p197 = scmp.eq.s32.totalorder %s19, 0
      %p198 = por %p196, %p197
      %p199 = scmp.ne.s32.totalorder %s191, %s193
      %p200 = scmp.eq.s32.totalorder %s24, 3
      %p201 = por %p199, %p200
      %p202 = scmp.ne.s32.totalorder %s193, %s194
      %p203 = scmp.eq.s32.totalorder %s24, 0
      %p204 = por %p202, %p203
      %p205 = scmp.ne.s32.totalorder %s193, %s194
      %p206 = scmp.eq.s32.totalorder %s25, 3
      %p207 = por %p205, %p206
      %p209 = scmp.ne.s32.totalorder %s194, %s208
      %p210 = scmp.eq.s32.totalorder %s25, 0
      %p211 = por %p209, %p210
      %s213 = sadd.s32 %s212, 1
      %p216 = scmp.eq.s32.totalorder %s19, 3
      %p217 = scmp.ne.s32.totalorder %s212, %s214
      %p218 = scmp.eq.s32.totalorder %s19, 0
      %p219 = por %p217, %p218
      %p220 = scmp.ne.s32.totalorder %s212, %s214
      %p221 = scmp.eq.s32.totalorder %s24, 3
      %p222 = por %p220, %p221
      %p223 = scmp.ne.s32.totalorder %s214, %s215
      %p224 = scmp.eq.s32.totalorder %s24, 0
      %p225 = por %p223, %p224
      %p226 = scmp.ne.s32.totalorder %s214, %s215
      %p227 = scmp.eq.s32.totalorder %s25, 3
      %p228 = por %p226, %p227
      %p230 = scmp.ne.s32.totalorder %s215, %s229
      %p231 = scmp.eq.s32.totalorder %s25, 0
      %p232 = por %p230, %p231
      %s234 = sadd.s32 %s233, 1
      %p237 = scmp.eq.s32.totalorder %s19, 3
      %p238 = scmp.ne.s32.totalorder %s233, %s235
      %p239 = scmp.eq.s32.totalorder %s19, 0
      %p240 = por %p238, %p239
      %p241 = scmp.ne.s32.totalorder %s233, %s235
      %p242 = scmp.eq.s32.totalorder %s24, 3
      %p243 = por %p241, %p242
      %p244 = scmp.ne.s32.totalorder %s235, %s236
      %p245 = scmp.eq.s32.totalorder %s24, 0
      %p246 = por %p244, %p245
      %p247 = scmp.ne.s32.totalorder %s235, %s236
      %p248 = scmp.eq.s32.totalorder %s25, 3
      %p249 = por %p247, %p248
      %p251 = scmp.ne.s32.totalorder %s236, %s250
      %p252 = scmp.eq.s32.totalorder %s25, 0
      %p253 = por %p251, %p252
      %s254 = ssub.s32 %s26, %s38
      %s255 = ssub.s32 %s27, %s34
      %s256 = sor.u32 %s254, %s255
      %p257 = scmp.eq.s32.totalorder %s256, 0
      %s259 = sadd.s32 %s258, 1
      %s260 = scalar_select %p257, %s258, %s259
      %p263 = pneg %p257
      %p264 = scmp.eq.s32.totalorder %s19, 3
      %p265 = por %p263, %p264
      %p266 = scmp.ne.s32.totalorder %s258, %s261
      %p267 = scmp.eq.s32.totalorder %s19, 0
      %p268 = por %p266, %p267
      %p269 = scmp.ne.s32.totalorder %s258, %s261
      %p270 = scmp.eq.s32.totalorder %s24, 3
      %p271 = por %p269, %p270
      %p272 = scmp.ne.s32.totalorder %s261, %s262
      %p273 = scmp.eq.s32.totalorder %s24, 0
      %p274 = por %p272, %p273
      %p275 = scmp.ne.s32.totalorder %s261, %s262
      %p276 = scmp.eq.s32.totalorder %s25, 3
      %p277 = por %p275, %p276
      %p279 = scmp.ne.s32.totalorder %s262, %s278
      %p280 = scmp.eq.s32.totalorder %s25, 0
      %p281 = por %p279, %p280
      %p282 = scmp.le.s32.totalorder 1, %s19
      %p283 = scmp.lt.s32.totalorder %s19, 5
      %p284 = pnand %p282, %p283
      %p285 = pneg %p284
      // Predicated region
      $region9: #{bottleneck_forward_nhwc.1} parent=5 // pred_check
        _
      $region10: #{bottleneck_forward_nhwc.1} parent=5 // pred_check_branch
        %287 = sbr.rel (%p284) target = $region12
      $region11: #{bottleneck_forward_nhwc.1} parent=5 // pred_region
        %s288 = ssub.s32 %s19, 1
        // Predicated region
        $region13: #{bottleneck_forward_nhwc.1} parent=11 // pred_check
          %p289 = pneg %p78
        $region14: #{bottleneck_forward_nhwc.1} parent=11 // pred_check_branch
          %291 = sbr.rel (%p289) target = $region16
        $region15: #{bottleneck_forward_nhwc.1} parent=11 // pred_region
          _
        $region16: #{bottleneck_forward_nhwc.1} parent=11 // pred_fallthru
          _
        // Predicated region
        $region17: #{bottleneck_forward_nhwc.1} parent=11 // pred_check
          %p292 = pneg %p99
        $region18: #{bottleneck_forward_nhwc.1} parent=11 // pred_check_branch
          %294 = sbr.rel (%p292) target = $region20
        $region19: #{bottleneck_forward_nhwc.1} parent=11 // pred_region
          _
        $region20: #{bottleneck_forward_nhwc.1} parent=11 // pred_fallthru
          _
        // Predicated region
        $region21: #{bottleneck_forward_nhwc.1} parent=11 // pred_check
          %p295 = pneg %p120
        $region22: #{bottleneck_forward_nhwc.1} parent=11 // pred_check_branch
          %297 = sbr.rel (%p295) target = $region24
        $region23: #{bottleneck_forward_nhwc.1} parent=11 // pred_region
          _
        $region24: #{bottleneck_forward_nhwc.1} parent=11 // pred_fallthru
          _
        // Predicated region
        $region25: #{bottleneck_forward_nhwc.1} parent=11 // pred_check
          %p298 = pneg %p141
        $region26: #{bottleneck_forward_nhwc.1} parent=11 // pred_check_branch
          %300 = sbr.rel (%p298) target = $region28
        $region27: #{bottleneck_forward_nhwc.1} parent=11 // pred_region
          _
        $region28: #{bottleneck_forward_nhwc.1} parent=11 // pred_fallthru
          _
        // Predicated region
        $region29: #{bottleneck_forward_nhwc.1} parent=11 // pred_check
          %p301 = pneg %p162
        $region30: #{bottleneck_forward_nhwc.1} parent=11 // pred_check_branch
          %303 = sbr.rel (%p301) target = $region32
        $region31: #{bottleneck_forward_nhwc.1} parent=11 // pred_region
          _
        $region32: #{bottleneck_forward_nhwc.1} parent=11 // pred_fallthru
          _
        // Predicated region
        $region33: #{bottleneck_forward_nhwc.1} parent=11 // pred_check
          %p304 = pneg %p183
        $region34: #{bottleneck_forward_nhwc.1} parent=11 // pred_check_branch
          %306 = sbr.rel (%p304) target = $region36
        $region35: #{bottleneck_forward_nhwc.1} parent=11 // pred_region
          _
        $region36: #{bottleneck_forward_nhwc.1} parent=11 // pred_fallthru
          _
        // Predicated region
        $region37: #{bottleneck_forward_nhwc.1} parent=11 // pred_check
          %p307 = pneg %p204
        $region38: #{bottleneck_forward_nhwc.1} parent=11 // pred_check_branch
          %309 = sbr.rel (%p307) target = $region40
        $region39: #{bottleneck_forward_nhwc.1} parent=11 // pred_region
          _
        $region40: #{bottleneck_forward_nhwc.1} parent=11 // pred_fallthru
          _
        // Predicated region
        $region41: #{bottleneck_forward_nhwc.1} parent=11 // pred_check
          %p310 = pneg %p225
        $region42: #{bottleneck_forward_nhwc.1} parent=11 // pred_check_branch
          %312 = sbr.rel (%p310) target = $region44
        $region43: #{bottleneck_forward_nhwc.1} parent=11 // pred_region
          _
        $region44: #{bottleneck_forward_nhwc.1} parent=11 // pred_fallthru
          _
        // Predicated region
        $region45: #{bottleneck_forward_nhwc.1} parent=11 // pred_check
          %p313 = pneg %p246
        $region46: #{bottleneck_forward_nhwc.1} parent=11 // pred_check_branch
          %315 = sbr.rel (%p313) target = $region48
        $region47: #{bottleneck_forward_nhwc.1} parent=11 // pred_region
          _
        $region48: #{bottleneck_forward_nhwc.1} parent=11 // pred_fallthru
          _
      $region12: #{bottleneck_forward_nhwc.1} parent=5 // pred_fallthru
        _
      %p316 = scmp.lt.s32.totalorder %s19, 4
      // Predicated region
      $region49: #{bottleneck_forward_nhwc.1} parent=5 // pred_check
        %p317 = pneg %p316
      $region50: #{bottleneck_forward_nhwc.1} parent=5 // pred_check_branch
        %319 = sbr.rel (%p317) target = $region52
      $region51: #{bottleneck_forward_nhwc.1} parent=5 // pred_region
        // Predicated region
        $region53: #{bottleneck_forward_nhwc.1} parent=51 // pred_check
          %p320 = pneg %p51
        $region54: #{bottleneck_forward_nhwc.1} parent=51 // pred_check_branch
          %322 = sbr.rel (%p320) target = $region56
        $region55: #{bottleneck_forward_nhwc.1} parent=51 // pred_region
          %p323 = scmp.lt.s32.totalorder %s26, 1
          %s324 = scalar_select %p323, %s26, 1
          %s325 = smul.addr %s324, 54
          %s326 = smul.addr %s325, 4
          %s327 = scalar_lea.vmem %s0, %s326
        $region56: #{bottleneck_forward_nhwc.1} parent=51 // pred_fallthru
          _
      $region52: #{bottleneck_forward_nhwc.1} parent=5 // pred_fallthru
        _
      %p328 = scmp.le.s32.totalorder 1, %s19
      %p329 = scmp.lt.s32.totalorder %s19, 5
      %p330 = pnand %p328, %p329
      %p331 = pneg %p330
      // Predicated region
      $region57: #{bottleneck_forward_nhwc.1} parent=5 // pred_check
        _
      $region58: #{bottleneck_forward_nhwc.1} parent=5 // pred_check_branch
        %333 = sbr.rel (%p330) target = $region60
      $region59: #{bottleneck_forward_nhwc.1} parent=5 // pred_region
        %s334 = ssub.s32 %s19, 1
        %p335 = scmp.lt.s32.totalorder %s28, 1
        %s336 = scalar_select %p335, %s28, 1
        %s337 = smul.addr %s336, 54
        %s338 = smul.addr %s337, 4
        %s339 = scalar_lea.vmem %s0, %s338
        %p340 = pneg %p57
        %p341 = pneg %p54
        %p342 = pneg %p78
        %p343 = pneg %p75
        %p344 = pneg %p99
        %p345 = pneg %p96
        %p346 = pneg %p120
        %p347 = pneg %p117
        %p348 = pneg %p141
        %p349 = pneg %p138
        %p350 = pneg %p162
        %p351 = pneg %p159
        %p352 = pneg %p183
        %p353 = pneg %p180
        %p354 = pneg %p204
        %p355 = pneg %p201
        %p356 = pneg %p225
        %p357 = pneg %p222
        %p358 = pneg %p246
        %p359 = pneg %p243
        %p360 = pneg %p274
        %p361 = pneg %p271
        %s362 = sand.u32 %s261, 1
        %s363 = scalar_lea.sflag [#allocation3], %s362
        %s364 = sand.u32 %s261, 1
        %s365 = smul.addr %s364, 128
        %s366 = scalar_lea.vmem [#allocation2], %s365
        %p367 = scmp.lt.s32.totalorder %s28, 1
        %s368 = scalar_select %p367, %s28, 1
        %s369 = smul.addr %s368, 54
        %s370 = smul.addr %s369, 4
        %s371 = scalar_lea.vmem %s0, %s370
        %s372 = smul.u32 8, %s29
        %s374 = smul.u32 %s29, 8
        %s375 = smul.u32 %s374, 3
        %s376 = smul.addr %s375, 4
        %s377 = scalar_lea.vmem %s371, %s376
        %v378 = vld [vmem:[%s377] sm:$0xf]
        %v379 = vld [vmem:[%s377 + $0x4] sm:$0xf]
        %v380 = vld [vmem:[%s377 + $0x8] sm:$0xf]
        %v381 = vld [vmem:[%s377 + $0xc] sm:$0xf]
        %v382 = vld [vmem:[%s377 + $0x10] sm:$0xf]
        %v383 = vld [vmem:[%s377 + $0x14] sm:$0xf]
        %v384 = vld [vmem:[%s377 + $0x18] sm:$0xf]
        %v385 = vld [vmem:[%s377 + $0x1c] sm:$0xf]
        %v386 = vld [vmem:[%s377 + $0x20] sm:$0xf]
        %v387 = vld [vmem:[%s377 + $0x24] sm:$0xf]
        %v388 = vld [vmem:[%s377 + $0x28] sm:$0xf]
        %v389 = vld [vmem:[%s377 + $0x2c] sm:$0xf]
        %v390 = vld [vmem:[%s377 + $0x30] sm:$0xf]
        %v391 = vld [vmem:[%s377 + $0x34] sm:$0xf]
        %v392 = vld [vmem:[%s377 + $0x38] sm:$0xf]
        %v393 = vld [vmem:[%s377 + $0x3c] sm:$0xf]
        %v394 = vld [vmem:[%s377 + $0x40] sm:$0xf]
        %v395 = vld [vmem:[%s377 + $0x44] sm:$0xf]
        %v396 = vld [vmem:[%s377 + $0x48] sm:$0xf]
        %v397 = vld [vmem:[%s377 + $0x4c] sm:$0xf]
        %v398 = vld [vmem:[%s377 + $0x50] sm:$0xf]
        %v399 = vld [vmem:[%s377 + $0x54] sm:$0xf]
        %v400 = vld [vmem:[%s377 + $0x58] sm:$0xf]
        %v401 = vld [vmem:[%s377 + $0x5c] sm:$0xf]
        %v402 = vld [vmem:[%s377 + $0x60] sm:$0xf]
        %v403 = vld [vmem:[%s377 + $0x64] sm:$0xf]
        %v404 = vld [vmem:[%s377 + $0x68] sm:$0xf]
        %v405 = vld [vmem:[%s377 + $0x6c] sm:$0xf]
        %v406 = vld [vmem:[%s377 + $0x70] sm:$0xf]
        %v407 = vld [vmem:[%s377 + $0x74] sm:$0xf]
        %s408 = smul.addr %s375, 4
        %s409 = scalar_lea.vmem %s1, %s408
        %v410 = vld [vmem:[%s409] sm:$0xf]
        %v411 = vld [vmem:[%s409 + $0x4] sm:$0xf]
        %v412 = vld [vmem:[%s409 + $0x8] sm:$0xf]
        %v413 = vld [vmem:[%s409 + $0xc] sm:$0xf]
        %v414 = vld [vmem:[%s409 + $0x10] sm:$0xf]
        %v415 = vld [vmem:[%s409 + $0x14] sm:$0xf]
        %v416 = vld [vmem:[%s409 + $0x18] sm:$0xf]
        %v417 = vld [vmem:[%s409 + $0x1c] sm:$0xf]
        %v418 = vld [vmem:[%s409 + $0x20] sm:$0xf]
        %v419 = vld [vmem:[%s409 + $0x24] sm:$0xf]
        %v420 = vld [vmem:[%s409 + $0x28] sm:$0xf]
        %v421 = vld [vmem:[%s409 + $0x2c] sm:$0xf]
        %v422 = vld [vmem:[%s409 + $0x30] sm:$0xf]
        %v423 = vld [vmem:[%s409 + $0x34] sm:$0xf]
        %v424 = vld [vmem:[%s409 + $0x38] sm:$0xf]
        %v425 = vld [vmem:[%s409 + $0x3c] sm:$0xf]
        %v426 = vld [vmem:[%s409 + $0x40] sm:$0xf]
        %v427 = vld [vmem:[%s409 + $0x44] sm:$0xf]
        %v428 = vld [vmem:[%s409 + $0x48] sm:$0xf]
        %v429 = vld [vmem:[%s409 + $0x4c] sm:$0xf]
        %v430 = vld [vmem:[%s409 + $0x50] sm:$0xf]
        %v431 = vld [vmem:[%s409 + $0x54] sm:$0xf]
        %v432 = vld [vmem:[%s409 + $0x58] sm:$0xf]
        %v433 = vld [vmem:[%s409 + $0x5c] sm:$0xf]
        %v434 = vld [vmem:[%s409 + $0x60] sm:$0xf]
        %v435 = vld [vmem:[%s409 + $0x64] sm:$0xf]
        %v436 = vld [vmem:[%s409 + $0x68] sm:$0xf]
        %v437 = vld [vmem:[%s409 + $0x6c] sm:$0xf]
        %v438 = vld [vmem:[%s409 + $0x70] sm:$0xf]
        %v439 = vld [vmem:[%s409 + $0x74] sm:$0xf]
        %v440 = vunpack.c.l.bf16 %v410
        %v441 = vunpack.c.l.bf16 %v411
        %v442 = vunpack.c.l.bf16 %v412
        %v443 = vunpack.c.l.bf16 %v413
        %v444 = vunpack.c.l.bf16 %v414
        %v445 = vunpack.c.l.bf16 %v415
        %v446 = vunpack.c.l.bf16 %v416
        %v447 = vunpack.c.l.bf16 %v417
        %v448 = vunpack.c.l.bf16 %v418
        %v449 = vunpack.c.l.bf16 %v419
        %v450 = vunpack.c.l.bf16 %v420
        %v451 = vunpack.c.l.bf16 %v421
        %v452 = vunpack.c.l.bf16 %v422
        %v453 = vunpack.c.l.bf16 %v423
        %v454 = vunpack.c.l.bf16 %v424
        %v455 = vunpack.c.l.bf16 %v425
        %v456 = vunpack.c.l.bf16 %v426
        %v457 = vunpack.c.l.bf16 %v427
        %v458 = vunpack.c.l.bf16 %v428
        %v459 = vunpack.c.l.bf16 %v429
        %v460 = vunpack.c.l.bf16 %v430
        %v461 = vunpack.c.l.bf16 %v431
        %v462 = vunpack.c.l.bf16 %v432
        %v463 = vunpack.c.l.bf16 %v433
        %v464 = vunpack.c.l.bf16 %v434
        %v465 = vunpack.c.l.bf16 %v435
        %v466 = vunpack.c.l.bf16 %v436
        %v467 = vunpack.c.l.bf16 %v437
        %v468 = vunpack.c.l.bf16 %v438
        %v469 = vunpack.c.l.bf16 %v439
        %v470 = vld [vmem:[%s2] sm:$0xf]
        %v471 = vld [vmem:[%s2 + $0x4] sm:$0xf]
        %v472 = vld [vmem:[%s2 + $0x8] sm:$0xf]
        %v473 = vld [vmem:[%s2 + $0xc] sm:$0xf]
        %v474 = vld [vmem:[%s2 + $0x10] sm:$0xf]
        %v475 = vld [vmem:[%s2 + $0x14] sm:$0xf]
        %v476 = vld [vmem:[%s2 + $0x18] sm:$0xf]
        %v477 = vld [vmem:[%s2 + $0x1c] sm:$0xf]
        %v478 = vld [vmem:[%s2 + $0x20] sm:$0xf]
        %v479 = vld [vmem:[%s2 + $0x24] sm:$0xf]
        %v480 = vld [vmem:[%s2 + $0x28] sm:$0xf]
        %v481 = vld [vmem:[%s2 + $0x2c] sm:$0xf]
        %v482 = vld [vmem:[%s2 + $0x30] sm:$0xf]
        %v483 = vld [vmem:[%s2 + $0x34] sm:$0xf]
        %v484 = vld [vmem:[%s2 + $0x38] sm:$0xf]
        %v485 = vld [vmem:[%s2 + $0x3c] sm:$0xf]
        %v486 = vld [vmem:[%s3] sm:$0x1]
        %v488 = vlaneseq
        %v489 = vshrl.u32 %v488, 7
        %v490 = vsub.s32 0, %v489
        %v491 = vrot.slane %v486, %v490
        %v523 = vunpack.c.l.b16 %v378
        %v524 = vunpack.c.l.b16 %v379
        %v525 = vunpack.c.l.b16 %v380
        %v526 = vunpack.c.l.b16 %v381
        %v527 = vunpack.c.l.b16 %v382
        %v528 = vunpack.c.l.b16 %v383
        %v529 = vunpack.c.l.b16 %v384
        %v530 = vunpack.c.l.b16 %v385
        %v531 = vunpack.c.l.b16 %v386
        %v532 = vunpack.c.l.b16 %v387
        %v533 = vunpack.c.l.b16 %v388
        %v534 = vunpack.c.l.b16 %v389
        %v535 = vunpack.c.l.b16 %v390
        %v536 = vunpack.c.l.b16 %v391
        %v537 = vunpack.c.l.b16 %v392
        %v538 = vunpack.c.l.b16 %v393
        %v539 = vunpack.c.l.b16 %v394
        %v540 = vunpack.c.l.b16 %v395
        %v541 = vunpack.c.l.b16 %v396
        %v542 = vunpack.c.l.b16 %v397
        %v543 = vunpack.c.l.b16 %v398
        %v544 = vunpack.c.l.b16 %v399
        %v545 = vunpack.c.l.b16 %v400
        %v546 = vunpack.c.l.b16 %v401
        %v547 = vunpack.c.l.b16 %v402
        %v548 = vunpack.c.l.b16 %v403
        %v549 = vunpack.c.l.b16 %v404
        %v550 = vunpack.c.l.b16 %v405
        %v551 = vunpack.c.l.b16 %v406
        %v552 = vunpack.c.l.b16 %v407
        %v553 = vpack.c.b16 %v524, %v523
        %v554 = vpack.c.b16 %v526, %v525
        %v555 = vpack.c.b16 %v528, %v527
        %v556 = vpack.c.b16 %v530, %v529
        %v557 = vpack.c.b16 %v532, %v531
        %v558 = vpack.c.b16 %v534, %v533
        %v559 = vpack.c.b16 %v536, %v535
        %v560 = vpack.c.b16 %v538, %v537
        %v561 = vpack.c.b16 %v540, %v539
        %v562 = vpack.c.b16 %v542, %v541
        %v563 = vpack.c.b16 %v544, %v543
        %v564 = vpack.c.b16 %v546, %v545
        %v565 = vpack.c.b16 %v548, %v547
        %v566 = vpack.c.b16 %v550, %v549
        %v567 = vpack.c.b16 %v552, %v551
        %v599 = vunpack.c.l.b16 %v470
        %v600 = vunpack.c.l.b16 %v471
        %v601 = vunpack.c.l.b16 %v472
        %v602 = vunpack.c.l.b16 %v473
        %v603 = vunpack.c.l.b16 %v474
        %v604 = vunpack.c.l.b16 %v475
        %v605 = vunpack.c.l.b16 %v476
        %v606 = vunpack.c.l.b16 %v477
        %v607 = vunpack.c.l.b16 %v478
        %v608 = vunpack.c.l.b16 %v479
        %v609 = vunpack.c.l.b16 %v480
        %v610 = vunpack.c.l.b16 %v481
        %v611 = vunpack.c.l.b16 %v482
        %v612 = vunpack.c.l.b16 %v483
        %v613 = vunpack.c.l.b16 %v484
        %v614 = vunpack.c.l.b16 %v485
        %v615 = vpack.c.b16 %v600, %v599
        %v616 = vpack.c.b16 %v602, %v601
        %v617 = vpack.c.b16 %v604, %v603
        %v618 = vpack.c.b16 %v606, %v605
        %v619 = vpack.c.b16 %v608, %v607
        %v620 = vpack.c.b16 %v610, %v609
        %v621 = vpack.c.b16 %v612, %v611
        %v622 = vpack.c.b16 %v614, %v613
        %631 = vmatprep.subr.bf16.mxu0 0
        %632 = vmatpush1.bf16.msra.mxu0 %v615
        %633 = vmatprep.subr.bf16.mxu0 0
        %634 = vmatpush1.bf16.msra.mxu0 %v616
        %635 = vmatprep.subr.bf16.mxu0 0
        %636 = vmatpush1.bf16.msra.mxu0 %v617
        %637 = vmatprep.subr.bf16.mxu0 0
        %638 = vmatpush1.bf16.msra.mxu0 %v618
        %639 = vmatprep.subr.bf16.mxu0 0
        %640 = vmatpush1.bf16.msra.mxu0 %v619
        %641 = vmatprep.subr.bf16.mxu0 0
        %642 = vmatpush1.bf16.msra.mxu0 %v620
        %643 = vmatprep.subr.bf16.mxu0 0
        %644 = vmatpush1.bf16.msra.mxu0 %v621
        %645 = vmatprep.subr.bf16.mxu0 0
        %646 = vmatpush1.bf16.msra.mxu0 %v622
        %647 = vmatprep.subr.bf16.mxu0 0
        %648 = vmatpush1.bf16.msra.mxu0 0
        %649 = vmatprep.subr.bf16.mxu0 0
        %650 = vmatpush1.bf16.msra.mxu0 0
        %651 = vmatprep.subr.bf16.mxu0 0
        %652 = vmatpush1.bf16.msra.mxu0 0
        %653 = vmatprep.subr.bf16.mxu0 0
        %654 = vmatpush1.bf16.msra.mxu0 0
        %655 = vmatprep.subr.bf16.mxu0 0
        %656 = vmatpush1.bf16.msra.mxu0 0
        %657 = vmatprep.subr.bf16.mxu0 0
        %658 = vmatpush1.bf16.msra.mxu0 0
        %659 = vmatprep.subr.bf16.mxu0 0
        %660 = vmatpush1.bf16.msra.mxu0 0
        %661 = vmatprep.subr.bf16.mxu0 0
        %662 = vmatpush1.bf16.msra.mxu0 0
        %663 = vmatprep.mubr.bf16.mxu0 0
        %664 = vmatmul.mubr.bf16.gmra.mrb[0].mxu0 %v553
        %v665 = vpop.f32.mrb[0].mxu0
        %v666 = vadd.f32 %v491, %v665
        %v667 = vpop.f32.mrb[0].mxu0
        %v668 = vpop.f32.mrb[0].mxu0
        %v669 = vadd.f32 %v491, %v668
        %v670 = vpop.f32.mrb[0].mxu0
        %671 = vmatprep.mubr.bf16.mxu0 0
        %672 = vmatmul.mubr.bf16.gmra.mrb[0].mxu0 %v554
        %v673 = vpop.f32.mrb[0].mxu0
        %v674 = vadd.f32 %v491, %v673
        %v675 = vpop.f32.mrb[0].mxu0
        %v676 = vpop.f32.mrb[0].mxu0
        %v677 = vadd.f32 %v491, %v676
        %v678 = vpop.f32.mrb[0].mxu0
        %679 = vmatprep.mubr.bf16.mxu0 0
        %680 = vmatmul.mubr.bf16.gmra.mrb[0].mxu0 %v555
        %v681 = vpop.f32.mrb[0].mxu0
        %v682 = vadd.f32 %v491, %v681
        %v683 = vpop.f32.mrb[0].mxu0
        %v684 = vpop.f32.mrb[0].mxu0
        %v685 = vadd.f32 %v491, %v684
        %v686 = vpop.f32.mrb[0].mxu0
        %687 = vmatprep.mubr.bf16.mxu0 0
        %688 = vmatmul.mubr.bf16.gmra.mrb[0].mxu0 %v556
        %v689 = vpop.f32.mrb[0].mxu0
        %v690 = vadd.f32 %v491, %v689
        %v691 = vpop.f32.mrb[0].mxu0
        %v692 = vpop.f32.mrb[0].mxu0
        %v693 = vadd.f32 %v491, %v692
        %v694 = vpop.f32.mrb[0].mxu0
        %695 = vmatprep.mubr.bf16.mxu0 0
        %696 = vmatmul.mubr.bf16.gmra.mrb[0].mxu0 %v557
        %v697 = vpop.f32.mrb[0].mxu0
        %v698 = vadd.f32 %v491, %v697
        %v699 = vpop.f32.mrb[0].mxu0
        %v700 = vpop.f32.mrb[0].mxu0
        %v701 = vadd.f32 %v491, %v700
        %v702 = vpop.f32.mrb[0].mxu0
        %703 = vmatprep.mubr.bf16.mxu0 0
        %704 = vmatmul.mubr.bf16.gmra.mrb[0].mxu0 %v558
        %v705 = vpop.f32.mrb[0].mxu0
        %v706 = vadd.f32 %v491, %v705
        %v707 = vpop.f32.mrb[0].mxu0
        %v708 = vpop.f32.mrb[0].mxu0
        %v709 = vadd.f32 %v491, %v708
        %v710 = vpop.f32.mrb[0].mxu0
        %711 = vmatprep.mubr.bf16.mxu0 0
        %712 = vmatmul.mubr.bf16.gmra.mrb[0].mxu0 %v559
        %v713 = vpop.f32.mrb[0].mxu0
        %v714 = vadd.f32 %v491, %v713
        %v715 = vpop.f32.mrb[0].mxu0
        %v716 = vpop.f32.mrb[0].mxu0
        %v717 = vadd.f32 %v491, %v716
        %v718 = vpop.f32.mrb[0].mxu0
        %719 = vmatprep.mubr.bf16.mxu0 0
        %720 = vmatmul.mubr.bf16.gmra.mrb[0].mxu0 %v560
        %v721 = vpop.f32.mrb[0].mxu0
        %v722 = vadd.f32 %v491, %v721
        %v723 = vpop.f32.mrb[0].mxu0
        %v724 = vpop.f32.mrb[0].mxu0
        %v725 = vadd.f32 %v491, %v724
        %v726 = vpop.f32.mrb[0].mxu0
        %727 = vmatprep.mubr.bf16.mxu0 0
        %728 = vmatmul.mubr.bf16.gmra.mrb[0].mxu0 %v561
        %v729 = vpop.f32.mrb[0].mxu0
        %v730 = vadd.f32 %v491, %v729
        %v731 = vpop.f32.mrb[0].mxu0
        %v732 = vpop.f32.mrb[0].mxu0
        %v733 = vadd.f32 %v491, %v732
        %v734 = vpop.f32.mrb[0].mxu0
        %735 = vmatprep.mubr.bf16.mxu0 0
        %736 = vmatmul.mubr.bf16.gmra.mrb[0].mxu0 %v562
        %v737 = vpop.f32.mrb[0].mxu0
        %v738 = vadd.f32 %v491, %v737
        %v739 = vpop.f32.mrb[0].mxu0
        %v740 = vpop.f32.mrb[0].mxu0
        %v741 = vadd.f32 %v491, %v740
        %v742 = vpop.f32.mrb[0].mxu0
        %743 = vmatprep.mubr.bf16.mxu0 0
        %744 = vmatmul.mubr.bf16.gmra.mrb[0].mxu0 %v563
        %v745 = vpop.f32.mrb[0].mxu0
        %v746 = vadd.f32 %v491, %v745
        %v747 = vpop.f32.mrb[0].mxu0
        %v748 = vpop.f32.mrb[0].mxu0
        %v749 = vadd.f32 %v491, %v748
        %v750 = vpop.f32.mrb[0].mxu0
        %751 = vmatprep.mubr.bf16.mxu0 0
        %752 = vmatmul.mubr.bf16.gmra.mrb[0].mxu0 %v564
        %v753 = vpop.f32.mrb[0].mxu0
        %v754 = vadd.f32 %v491, %v753
        %v755 = vpop.f32.mrb[0].mxu0
        %v756 = vpop.f32.mrb[0].mxu0
        %v757 = vadd.f32 %v491, %v756
        %v758 = vpop.f32.mrb[0].mxu0
        %759 = vmatprep.mubr.bf16.mxu0 0
        %760 = vmatmul.mubr.bf16.gmra.mrb[0].mxu0 %v565
        %v761 = vpop.f32.mrb[0].mxu0
        %v762 = vadd.f32 %v491, %v761
        %v763 = vpop.f32.mrb[0].mxu0
        %v764 = vpop.f32.mrb[0].mxu0
        %v765 = vadd.f32 %v491, %v764
        %v766 = vpop.f32.mrb[0].mxu0
        %767 = vmatprep.mubr.bf16.mxu0 0
        %768 = vmatmul.mubr.bf16.gmra.mrb[0].mxu0 %v566
        %v769 = vpop.f32.mrb[0].mxu0
        %v770 = vadd.f32 %v491, %v769
        %v771 = vpop.f32.mrb[0].mxu0
        %v772 = vpop.f32.mrb[0].mxu0
        %v773 = vadd.f32 %v491, %v772
        %v774 = vpop.f32.mrb[0].mxu0
        %775 = vmatprep.mubr.bf16.mxu0 0
        %776 = vmatmul.mubr.bf16.gmra.mrb[0].mxu0 %v567
        %v777 = vpop.f32.mrb[0].mxu0
        %v778 = vadd.f32 %v491, %v777
        %v779 = vpop.f32.mrb[0].mxu0
        %v780 = vpop.f32.mrb[0].mxu0
        %v781 = vadd.f32 %v491, %v780
        %v782 = vpop.f32.mrb[0].mxu0
        %783 = vdwg.mxu0
        %v784 = vmax.f32 %v666, 0.0
        %v785 = vmax.f32 %v669, 0.0
        %v786 = vmax.f32 %v674, 0.0
        %v787 = vmax.f32 %v677, 0.0
        %v788 = vmax.f32 %v682, 0.0
        %v789 = vmax.f32 %v685, 0.0
        %v790 = vmax.f32 %v690, 0.0
        %v791 = vmax.f32 %v693, 0.0
        %v792 = vmax.f32 %v698, 0.0
        %v793 = vmax.f32 %v701, 0.0
        %v794 = vmax.f32 %v706, 0.0
        %v795 = vmax.f32 %v709, 0.0
        %v796 = vmax.f32 %v714, 0.0
        %v797 = vmax.f32 %v717, 0.0
        %v798 = vmax.f32 %v722, 0.0
        %v799 = vmax.f32 %v725, 0.0
        %v800 = vmax.f32 %v730, 0.0
        %v801 = vmax.f32 %v733, 0.0
        %v802 = vmax.f32 %v738, 0.0
        %v803 = vmax.f32 %v741, 0.0
        %v804 = vmax.f32 %v746, 0.0
        %v805 = vmax.f32 %v749, 0.0
        %v806 = vmax.f32 %v754, 0.0
        %v807 = vmax.f32 %v757, 0.0
        %v808 = vmax.f32 %v762, 0.0
        %v809 = vmax.f32 %v765, 0.0
        %v810 = vmax.f32 %v770, 0.0
        %v811 = vmax.f32 %v773, 0.0
        %v812 = vmax.f32 %v778, 0.0
        %v813 = vmax.f32 %v781, 0.0
        %815 = vset.pattern.permute.xlu0 0
        %816 = vperm.xlu0 %815, %v440
        %v817 = vpop.permute.xlu0 %816
        %820 = vset.pattern.permute.xlu0 0
        %821 = vperm.xlu0 %820, %v441
        %v822 = vpop.permute.xlu0 %821
        %825 = vset.pattern.permute.xlu0 0
        %826 = vperm.xlu0 %825, %v442
        %v827 = vpop.permute.xlu0 %826
        %830 = vset.pattern.permute.xlu0 0
        %831 = vperm.xlu0 %830, %v443
        %v832 = vpop.permute.xlu0 %831
        %835 = vset.pattern.permute.xlu0 0
        %836 = vperm.xlu0 %835, %v444
        %v837 = vpop.permute.xlu0 %836
        %840 = vset.pattern.permute.xlu0 0
        %841 = vperm.xlu0 %840, %v445
        %v842 = vpop.permute.xlu0 %841
        %845 = vset.pattern.permute.xlu0 0
        %846 = vperm.xlu0 %845, %v446
        %v847 = vpop.permute.xlu0 %846
        %850 = vset.pattern.permute.xlu0 0
        %851 = vperm.xlu0 %850, %v447
        %v852 = vpop.permute.xlu0 %851
        %855 = vset.pattern.permute.xlu0 0
        %856 = vperm.xlu0 %855, %v448
        %v857 = vpop.permute.xlu0 %856
        %860 = vset.pattern.permute.xlu0 0
        %861 = vperm.xlu0 %860, %v449
        %v862 = vpop.permute.xlu0 %861
        %865 = vset.pattern.permute.xlu0 0
        %866 = vperm.xlu0 %865, %v450
        %v867 = vpop.permute.xlu0 %866
        %870 = vset.pattern.permute.xlu0 0
        %871 = vperm.xlu0 %870, %v451
        %v872 = vpop.permute.xlu0 %871
        %875 = vset.pattern.permute.xlu0 0
        %876 = vperm.xlu0 %875, %v452
        %v877 = vpop.permute.xlu0 %876
        %880 = vset.pattern.permute.xlu0 0
        %881 = vperm.xlu0 %880, %v453
        %v882 = vpop.permute.xlu0 %881
        %885 = vset.pattern.permute.xlu0 0
        %886 = vperm.xlu0 %885, %v454
        %v887 = vpop.permute.xlu0 %886
        %890 = vset.pattern.permute.xlu0 0
        %891 = vperm.xlu0 %890, %v455
        %v892 = vpop.permute.xlu0 %891
        %895 = vset.pattern.permute.xlu0 0
        %896 = vperm.xlu0 %895, %v456
        %v897 = vpop.permute.xlu0 %896
        %900 = vset.pattern.permute.xlu0 0
        %901 = vperm.xlu0 %900, %v457
        %v902 = vpop.permute.xlu0 %901
        %905 = vset.pattern.permute.xlu0 0
        %906 = vperm.xlu0 %905, %v458
        %v907 = vpop.permute.xlu0 %906
        %910 = vset.pattern.permute.xlu0 0
        %911 = vperm.xlu0 %910, %v459
        %v912 = vpop.permute.xlu0 %911
        %915 = vset.pattern.permute.xlu0 0
        %916 = vperm.xlu0 %915, %v460
        %v917 = vpop.permute.xlu0 %916
        %920 = vset.pattern.permute.xlu0 0
        %921 = vperm.xlu0 %920, %v461
        %v922 = vpop.permute.xlu0 %921
        %925 = vset.pattern.permute.xlu0 0
        %926 = vperm.xlu0 %925, %v462
        %v927 = vpop.permute.xlu0 %926
        %930 = vset.pattern.permute.xlu0 0
        %931 = vperm.xlu0 %930, %v463
        %v932 = vpop.permute.xlu0 %931
        %935 = vset.pattern.permute.xlu0 0
        %936 = vperm.xlu0 %935, %v464
        %v937 = vpop.permute.xlu0 %936
        %940 = vset.pattern.permute.xlu0 0
        %941 = vperm.xlu0 %940, %v465
        %v942 = vpop.permute.xlu0 %941
        %945 = vset.pattern.permute.xlu0 0
        %946 = vperm.xlu0 %945, %v466
        %v947 = vpop.permute.xlu0 %946
        %950 = vset.pattern.permute.xlu0 0
        %951 = vperm.xlu0 %950, %v467
        %v952 = vpop.permute.xlu0 %951
        %955 = vset.pattern.permute.xlu0 0
        %956 = vperm.xlu0 %955, %v468
        %v957 = vpop.permute.xlu0 %956
        %960 = vset.pattern.permute.xlu0 0
        %961 = vperm.xlu0 %960, %v469
        %v962 = vpop.permute.xlu0 %961
        %v964 = vmul.f32 %v784, %v817
        %v965 = vmul.f32 %v785, %v822
        %v966 = vmul.f32 %v786, %v827
        %v967 = vmul.f32 %v787, %v832
        %v968 = vmul.f32 %v788, %v837
        %v969 = vmul.f32 %v789, %v842
        %v970 = vmul.f32 %v790, %v847
        %v971 = vmul.f32 %v791, %v852
        %v972 = vmul.f32 %v792, %v857
        %v973 = vmul.f32 %v793, %v862
        %v974 = vmul.f32 %v794, %v867
        %v975 = vmul.f32 %v795, %v872
        %v976 = vmul.f32 %v796, %v877
        %v977 = vmul.f32 %v797, %v882
        %v978 = vmul.f32 %v798, %v887
        %v979 = vmul.f32 %v799, %v892
        %v980 = vmul.f32 %v800, %v897
        %v981 = vmul.f32 %v801, %v902
        %v982 = vmul.f32 %v802, %v907
        %v983 = vmul.f32 %v803, %v912
        %v984 = vmul.f32 %v804, %v917
        %v985 = vmul.f32 %v805, %v922
        %v986 = vmul.f32 %v806, %v927
        %v987 = vmul.f32 %v807, %v932
        %v988 = vmul.f32 %v808, %v937
        %v989 = vmul.f32 %v809, %v942
        %v990 = vmul.f32 %v810, %v947
        %v991 = vmul.f32 %v811, %v952
        %v992 = vmul.f32 %v812, %v957
        %v993 = vmul.f32 %v813, %v962
        %v994 = vpack.c.bf16 %v965, %v964
        %v995 = vpack.c.bf16 %v966, %v966
        %v996 = vpack.c.bf16 %v968, %v967
        %v997 = vpack.c.bf16 %v969, %v969
        %v998 = vpack.c.bf16 %v971, %v970
        %v999 = vpack.c.bf16 %v972, %v972
        %v1000 = vpack.c.bf16 %v974, %v973
        %v1001 = vpack.c.bf16 %v975, %v975
        %v1002 = vpack.c.bf16 %v977, %v976
        %v1003 = vpack.c.bf16 %v978, %v978
        %v1004 = vpack.c.bf16 %v980, %v979
        %v1005 = vpack.c.bf16 %v981, %v981
        %v1006 = vpack.c.bf16 %v983, %v982
        %v1007 = vpack.c.bf16 %v984, %v984
        %v1008 = vpack.c.bf16 %v986, %v985
        %v1009 = vpack.c.bf16 %v987, %v987
        %v1010 = vpack.c.bf16 %v989, %v988
        %v1011 = vpack.c.bf16 %v990, %v990
        %v1012 = vpack.c.bf16 %v992, %v991
        %v1013 = vpack.c.bf16 %v993, %v993
        %v1014 = vld [vmem:[%s5] sm:$0x1]
        %vm1015 = vsmask.f32 7424
        %v1017 = vshrl.u32 %v994, 16
        %v1019 = vshll.u32 %v994, 16
        %v1021 = vrot.slane %v1019, 1
        %v1022 = vor.u32 %v1017, %v1021
        %v1024 = vshll.u32 %v995, 16
        %v1026 = vrot.slane %v1024, 1
        %v1027 = vsel %vm1015, %v1022, %v1026
        %v1029 = vshrl.u32 %v996, 16
        %v1031 = vshll.u32 %v996, 16
        %v1033 = vrot.slane %v1031, 1
        %v1034 = vor.u32 %v1029, %v1033
        %v1036 = vshll.u32 %v997, 16
        %v1038 = vrot.slane %v1036, 1
        %v1039 = vsel %vm1015, %v1034, %v1038
        %v1041 = vshrl.u32 %v998, 16
        %v1043 = vshll.u32 %v998, 16
        %v1045 = vrot.slane %v1043, 1
        %v1046 = vor.u32 %v1041, %v1045
        %v1048 = vshll.u32 %v999, 16
        %v1050 = vrot.slane %v1048, 1
        %v1051 = vsel %vm1015, %v1046, %v1050
        %v1053 = vshrl.u32 %v1000, 16
        %v1055 = vshll.u32 %v1000, 16
        %v1057 = vrot.slane %v1055, 1
        %v1058 = vor.u32 %v1053, %v1057
        %v1060 = vshll.u32 %v1001, 16
        %v1062 = vrot.slane %v1060, 1
        %v1063 = vsel %vm1015, %v1058, %v1062
        %v1065 = vshrl.u32 %v1002, 16
        %v1067 = vshll.u32 %v1002, 16
        %v1069 = vrot.slane %v1067, 1
        %v1070 = vor.u32 %v1065, %v1069
        %v1072 = vshll.u32 %v1003, 16
        %v1074 = vrot.slane %v1072, 1
        %v1075 = vsel %vm1015, %v1070, %v1074
        %v1077 = vshrl.u32 %v1004, 16
        %v1079 = vshll.u32 %v1004, 16
        %v1081 = vrot.slane %v1079, 1
        %v1082 = vor.u32 %v1077, %v1081
        %v1084 = vshll.u32 %v1005, 16
        %v1086 = vrot.slane %v1084, 1
        %v1087 = vsel %vm1015, %v1082, %v1086
        %v1089 = vshrl.u32 %v1006, 16
        %v1091 = vshll.u32 %v1006, 16
        %v1093 = vrot.slane %v1091, 1
        %v1094 = vor.u32 %v1089, %v1093
        %v1096 = vshll.u32 %v1007, 16
        %v1098 = vrot.slane %v1096, 1
        %v1099 = vsel %vm1015, %v1094, %v1098
        %v1101 = vshrl.u32 %v1008, 16
        %v1103 = vshll.u32 %v1008, 16
        %v1105 = vrot.slane %v1103, 1
        %v1106 = vor.u32 %v1101, %v1105
        %v1108 = vshll.u32 %v1009, 16
        %v1110 = vrot.slane %v1108, 1
        %v1111 = vsel %vm1015, %v1106, %v1110
        %vm1136 = vcmask 1046528
        %v1137 = vrot.slane %v994, 1
        %v1138 = vrot.slane %v995, 1
        %v1139 = vsel %vm1136, %v1137, %v1138
        %v1140 = vrot.slane %v996, 1
        %v1141 = vrot.slane %v997, 1
        %v1142 = vsel %vm1136, %v1140, %v1141
        %v1143 = vrot.slane %v998, 1
        %v1144 = vrot.slane %v999, 1
        %v1145 = vsel %vm1136, %v1143, %v1144
        %v1146 = vrot.slane %v1000, 1
        %v1147 = vrot.slane %v1001, 1
        %v1148 = vsel %vm1136, %v1146, %v1147
        %v1149 = vrot.slane %v1002, 1
        %v1150 = vrot.slane %v1003, 1
        %v1151 = vsel %vm1136, %v1149, %v1150
        %v1152 = vrot.slane %v1004, 1
        %v1153 = vrot.slane %v1005, 1
        %v1154 = vsel %vm1136, %v1152, %v1153
        %v1155 = vrot.slane %v1006, 1
        %v1156 = vrot.slane %v1007, 1
        %v1157 = vsel %vm1136, %v1155, %v1156
        %v1158 = vrot.slane %v1008, 1
        %v1159 = vrot.slane %v1009, 1
        %v1160 = vsel %vm1136, %v1158, %v1159
        %v1169 = vld [vmem:[%s4] sm:$0xf]
        %v1170 = vld [vmem:[%s4 + $0x4] sm:$0xf]
        %v1171 = vld [vmem:[%s4 + $0x8] sm:$0xf]
        %v1172 = vld [vmem:[%s4 + $0xc] sm:$0xf]
        %v1173 = vld [vmem:[%s4 + $0x10] sm:$0xf]
        %v1174 = vld [vmem:[%s4 + $0x14] sm:$0xf]
        %v1175 = vld [vmem:[%s4 + $0x18] sm:$0xf]
        %v1176 = vld [vmem:[%s4 + $0x1c] sm:$0xf]
        %v1177 = vld [vmem:[%s4 + $0x20] sm:$0xf]
        %v1178 = vld [vmem:[%s4 + $0x24] sm:$0xf]
        %v1179 = vld [vmem:[%s4 + $0x28] sm:$0xf]
        %v1180 = vld [vmem:[%s4 + $0x2c] sm:$0xf]
        %v1181 = vld [vmem:[%s4 + $0x30] sm:$0xf]
        %v1182 = vld [vmem:[%s4 + $0x34] sm:$0xf]
        %v1183 = vld [vmem:[%s4 + $0x38] sm:$0xf]
        %v1184 = vld [vmem:[%s4 + $0x3c] sm:$0xf]
        %v1185 = vld [vmem:[%s4 + $0x40] sm:$0xf]
        %v1186 = vld [vmem:[%s4 + $0x44] sm:$0xf]
        %v1187 = vld [vmem:[%s4 + $0x48] sm:$0xf]
        %v1188 = vld [vmem:[%s4 + $0x4c] sm:$0xf]
        %v1189 = vld [vmem:[%s4 + $0x50] sm:$0xf]
        %v1190 = vld [vmem:[%s4 + $0x54] sm:$0xf]
        %v1191 = vld [vmem:[%s4 + $0x58] sm:$0xf]
        %v1192 = vld [vmem:[%s4 + $0x5c] sm:$0xf]
        %v1193 = vld [vmem:[%s4 + $0x60] sm:$0xf]
        %v1194 = vld [vmem:[%s4 + $0x64] sm:$0xf]
        %v1195 = vld [vmem:[%s4 + $0x68] sm:$0xf]
        %v1196 = vld [vmem:[%s4 + $0x6c] sm:$0xf]
        %v1197 = vld [vmem:[%s4 + $0x70] sm:$0xf]
        %v1198 = vld [vmem:[%s4 + $0x74] sm:$0xf]
        %v1199 = vld [vmem:[%s4 + $0x78] sm:$0xf]
        %v1200 = vld [vmem:[%s4 + $0x7c] sm:$0xf]
        %v1201 = vld [vmem:[%s4 + $0x80] sm:$0xf]
        %v1202 = vld [vmem:[%s4 + $0x84] sm:$0xf]
        %v1203 = vld [vmem:[%s4 + $0x88] sm:$0xf]
        %v1204 = vld [vmem:[%s4 + $0x8c] sm:$0xf]
        %v1205 = vld [vmem:[%s4 + $0x90] sm:$0xf]
        %v1206 = vld [vmem:[%s4 + $0x94] sm:$0xf]
        %v1207 = vld [vmem:[%s4 + $0x98] sm:$0xf]
        %v1208 = vld [vmem:[%s4 + $0x9c] sm:$0xf]
        %v1209 = vld [vmem:[%s4 + $0xa0] sm:$0xf]
        %v1210 = vld [vmem:[%s4 + $0xa4] sm:$0xf]
        %v1211 = vld [vmem:[%s4 + $0xa8] sm:$0xf]
        %v1212 = vld [vmem:[%s4 + $0xac] sm:$0xf]
        %v1213 = vld [vmem:[%s4 + $0xb0] sm:$0xf]
        %v1214 = vld [vmem:[%s4 + $0xb4] sm:$0xf]
        %v1215 = vld [vmem:[%s4 + $0xb8] sm:$0xf]
        %v1216 = vld [vmem:[%s4 + $0xbc] sm:$0xf]
        %v1265 = vunpack.c.l.b16 %v1169
        %v1266 = vunpack.c.l.b16 %v1170
        %v1267 = vunpack.c.l.b16 %v1171
        %v1268 = vunpack.c.l.b16 %v1172
        %v1269 = vunpack.c.l.b16 %v1173
        %v1270 = vunpack.c.l.b16 %v1174
        %v1271 = vunpack.c.l.b16 %v1175
        %v1272 = vunpack.c.l.b16 %v1176
        %v1273 = vunpack.c.l.b16 %v1177
        %v1274 = vunpack.c.l.b16 %v1178
        %v1275 = vunpack.c.l.b16 %v1179
        %v1276 = vunpack.c.l.b16 %v1180
        %v1277 = vunpack.c.l.b16 %v1181
        %v1278 = vunpack.c.l.b16 %v1182
        %v1279 = vunpack.c.l.b16 %v1183
        %v1280 = vunpack.c.l.b16 %v1184
        %v1281 = vunpack.c.l.b16 %v1185
        %v1282 = vunpack.c.l.b16 %v1186
        %v1283 = vunpack.c.l.b16 %v1187
        %v1284 = vunpack.c.l.b16 %v1188
        %v1285 = vunpack.c.l.b16 %v1189
        %v1286 = vunpack.c.l.b16 %v1190
        %v1287 = vunpack.c.l.b16 %v1191
        %v1288 = vunpack.c.l.b16 %v1192
        %v1289 = vunpack.c.l.b16 %v1193
        %v1290 = vunpack.c.l.b16 %v1194
        %v1291 = vunpack.c.l.b16 %v1195
        %v1292 = vunpack.c.l.b16 %v1196
        %v1293 = vunpack.c.l.b16 %v1197
        %v1294 = vunpack.c.l.b16 %v1198
        %v1295 = vunpack.c.l.b16 %v1199
        %v1296 = vunpack.c.l.b16 %v1200
        %v1297 = vunpack.c.l.b16 %v1201
        %v1298 = vunpack.c.l.b16 %v1202
        %v1299 = vunpack.c.l.b16 %v1203
        %v1300 = vunpack.c.l.b16 %v1204
        %v1301 = vunpack.c.l.b16 %v1205
        %v1302 = vunpack.c.l.b16 %v1206
        %v1303 = vunpack.c.l.b16 %v1207
        %v1304 = vunpack.c.l.b16 %v1208
        %v1305 = vunpack.c.l.b16 %v1209
        %v1306 = vunpack.c.l.b16 %v1210
        %v1307 = vunpack.c.l.b16 %v1211
        %v1308 = vunpack.c.l.b16 %v1212
        %v1309 = vunpack.c.l.b16 %v1213
        %v1310 = vunpack.c.l.b16 %v1214
        %v1311 = vunpack.c.l.b16 %v1215
        %v1312 = vunpack.c.l.b16 %v1216
        %v1313 = vpack.c.b16 %v1266, %v1265
        %v1314 = vpack.c.b16 %v1268, %v1267
        %v1315 = vpack.c.b16 %v1270, %v1269
        %v1316 = vpack.c.b16 %v1272, %v1271
        %v1317 = vpack.c.b16 %v1274, %v1273
        %v1318 = vpack.c.b16 %v1276, %v1275
        %v1319 = vpack.c.b16 %v1278, %v1277
        %v1320 = vpack.c.b16 %v1280, %v1279
        %v1321 = vpack.c.b16 %v1282, %v1281
        %v1322 = vpack.c.b16 %v1284, %v1283
        %v1323 = vpack.c.b16 %v1286, %v1285
        %v1324 = vpack.c.b16 %v1288, %v1287
        %v1325 = vpack.c.b16 %v1290, %v1289
        %v1326 = vpack.c.b16 %v1292, %v1291
        %v1327 = vpack.c.b16 %v1294, %v1293
        %v1328 = vpack.c.b16 %v1296, %v1295
        %v1329 = vpack.c.b16 %v1298, %v1297
        %v1330 = vpack.c.b16 %v1300, %v1299
        %v1331 = vpack.c.b16 %v1302, %v1301
        %v1332 = vpack.c.b16 %v1304, %v1303
        %v1333 = vpack.c.b16 %v1306, %v1305
        %v1334 = vpack.c.b16 %v1308, %v1307
        %v1335 = vpack.c.b16 %v1310, %v1309
        %v1336 = vpack.c.b16 %v1312, %v1311
        %1361 = vmatprep.subr.bf16.mxu0 0
        %1362 = vmatpush1.bf16.msra.mxu0 %v1313
        %1363 = vmatprep.subr.bf16.mxu0 0
        %1364 = vmatpush1.bf16.msra.mxu0 %v1314
        %1365 = vmatprep.subr.bf16.mxu0 0
        %1366 = vmatpush1.bf16.msra.mxu0 %v1315
        %1367 = vmatprep.subr.bf16.mxu0 0
        %1368 = vmatpush1.bf16.msra.mxu0 %v1316
        %1369 = vmatprep.subr.bf16.mxu0 0
        %1370 = vmatpush1.bf16.msra.mxu0 %v1317
        %1371 = vmatprep.subr.bf16.mxu0 0
        %1372 = vmatpush1.bf16.msra.mxu0 %v1318
        %1373 = vmatprep.subr.bf16.mxu0 0
        %1374 = vmatpush1.bf16.msra.mxu0 %v1319
        %1375 = vmatprep.subr.bf16.mxu0 0
        %1376 = vmatpush1.bf16.msra.mxu0 %v1320
        %1377 = vmatprep.subr.bf16.mxu0 0
        %1378 = vmatpush1.bf16.msra.mxu0 %v1321
        %1379 = vmatprep.subr.bf16.mxu0 0
        %1380 = vmatpush1.bf16.msra.mxu0 %v1322
        %1381 = vmatprep.subr.bf16.mxu0 0
        %1382 = vmatpush1.bf16.msra.mxu0 %v1323
        %1383 = vmatprep.subr.bf16.mxu0 0
        %1384 = vmatpush1.bf16.msra.mxu0 %v1324
        %1385 = vmatprep.subr.bf16.mxu0 0
        %1386 = vmatpush1.bf16.msra.mxu0 %v1325
        %1387 = vmatprep.subr.bf16.mxu0 0
        %1388 = vmatpush1.bf16.msra.mxu0 %v1326
        %1389 = vmatprep.subr.bf16.mxu0 0
        %1390 = vmatpush1.bf16.msra.mxu0 %v1327
        %1391 = vmatprep.subr.bf16.mxu0 0
        %1392 = vmatpush1.bf16.msra.mxu0 %v1328
        %1393 = vmatprep.mubr.bf16.mxu0 %v1027
        %1394 = vmatmul.mubr.bf16.gmra.mrb[0].mxu0 %v994
        %v1395 = vpop.f32.mrb[0].mxu0
        %v1396 = vadd.f32 0.0, %v1395
        %v1397 = vpop.f32.mrb[0].mxu0
        %v1398 = vpop.f32.mrb[0].mxu0
        %v1399 = vadd.f32 0.0, %v1398
        %v1400 = vpop.f32.mrb[0].mxu0
        %1401 = vmatprep.mubr.bf16.mxu0 %v1039
        %1402 = vmatmul.mubr.bf16.gmra.mrb[0].mxu0 %v996
        %v1403 = vpop.f32.mrb[0].mxu0
        %v1404 = vadd.f32 0.0, %v1403
        %v1405 = vpop.f32.mrb[0].mxu0
        %v1406 = vpop.f32.mrb[0].mxu0
        %v1407 = vadd.f32 0.0, %v1406
        %v1408 = vpop.f32.mrb[0].mxu0
        %1409 = vmatprep.mubr.bf16.mxu0 %v1051
        %1410 = vmatmul.mubr.bf16.gmra.mrb[0].mxu0 %v998
        %v1411 = vpop.f32.mrb[0].mxu0
        %v1412 = vadd.f32 0.0, %v1411
        %v1413 = vpop.f32.mrb[0].mxu0
        %v1414 = vpop.f32.mrb[0].mxu0
        %v1415 = vadd.f32 0.0, %v1414
        %v1416 = vpop.f32.mrb[0].mxu0
        %1417 = vmatprep.mubr.bf16.mxu0 %v1063
        %1418 = vmatmul.mubr.bf16.gmra.mrb[0].mxu0 %v1000
        %v1419 = vpop.f32.mrb[0].mxu0
        %v1420 = vadd.f32 0.0, %v1419
        %v1421 = vpop.f32.mrb[0].mxu0
        %v1422 = vpop.f32.mrb[0].mxu0
        %v1423 = vadd.f32 0.0, %v1422
        %v1424 = vpop.f32.mrb[0].mxu0
        %1425 = vmatprep.mubr.bf16.mxu0 %v1075
        %1426 = vmatmul.mubr.bf16.gmra.mrb[0].mxu0 %v1002
        %v1427 = vpop.f32.mrb[0].mxu0
        %v1428 = vadd.f32 0.0, %v1427
        %v1429 = vpop.f32.mrb[0].mxu0
        %v1430 = vpop.f32.mrb[0].mxu0
        %v1431 = vadd.f32 0.0, %v1430
        %v1432 = vpop.f32.mrb[0].mxu0
        %1433 = vmatprep.mubr.bf16.mxu0 %v1087
        %1434 = vmatmul.mubr.bf16.gmra.mrb[0].mxu0 %v1004
        %v1435 = vpop.f32.mrb[0].mxu0
        %v1436 = vadd.f32 0.0, %v1435
        %v1437 = vpop.f32.mrb[0].mxu0
        %v1438 = vpop.f32.mrb[0].mxu0
        %v1439 = vadd.f32 0.0, %v1438
        %v1440 = vpop.f32.mrb[0].mxu0
        %1441 = vmatprep.mubr.bf16.mxu0 %v1099
        %1442 = vmatmul.mubr.bf16.gmra.mrb[0].mxu0 %v1006
        %v1443 = vpop.f32.mrb[0].mxu0
        %v1444 = vadd.f32 0.0, %v1443
        %v1445 = vpop.f32.mrb[0].mxu0
        %v1446 = vpop.f32.mrb[0].mxu0
        %v1447 = vadd.f32 0.0, %v1446
        %v1448 = vpop.f32.mrb[0].mxu0
        %1449 = vmatprep.mubr.bf16.mxu0 %v1111
        %1450 = vmatmul.mubr.bf16.gmra.mrb[0].mxu0 %v1008
        %v1451 = vpop.f32.mrb[0].mxu0
        %v1452 = vadd.f32 0.0, %v1451
        %v1453 = vpop.f32.mrb[0].mxu0
        %v1454 = vpop.f32.mrb[0].mxu0
        %v1455 = vadd.f32 0.0, %v1454
        %v1456 = vpop.f32.mrb[0].mxu0
        %1457 = vdwg.mxu0
        %1458 = vmatprep.subr.bf16.mxu0 0
        %1459 = vmatpush1.bf16.msra.mxu0 %v1329
        %1460 = vmatprep.subr.bf16.mxu0 0
        %1461 = vmatpush1.bf16.msra.mxu0 %v1330
        %1462 = vmatprep.subr.bf16.mxu0 0
        %1463 = vmatpush1.bf16.msra.mxu0 %v1331
        %1464 = vmatprep.subr.bf16.mxu0 0
        %1465 = vmatpush1.bf16.msra.mxu0 %v1332
        %1466 = vmatprep.subr.bf16.mxu0 0
        %1467 = vmatpush1.bf16.msra.mxu0 %v1333
        %1468 = vmatprep.subr.bf16.mxu0 0
        %1469 = vmatpush1.bf16.msra.mxu0 %v1334
        %1470 = vmatprep.subr.bf16.mxu0 0
        %1471 = vmatpush1.bf16.msra.mxu0 %v1335
        %1472 = vmatprep.subr.bf16.mxu0 0
        %1473 = vmatpush1.bf16.msra.mxu0 %v1336
        %1474 = vmatprep.subr.bf16.mxu0 0
        %1475 = vmatpush1.bf16.msra.mxu0 0
        %1476 = vmatprep.subr.bf16.mxu0 0
        %1477 = vmatpush1.bf16.msra.mxu0 0
        %1478 = vmatprep.subr.bf16.mxu0 0
        %1479 = vmatpush1.bf16.msra.mxu0 0
        %1480 = vmatprep.subr.bf16.mxu0 0
        %1481 = vmatpush1.bf16.msra.mxu0 0
        %1482 = vmatprep.subr.bf16.mxu0 0
        %1483 = vmatpush1.bf16.msra.mxu0 0
        %1484 = vmatprep.subr.bf16.mxu0 0
        %1485 = vmatpush1.bf16.msra.mxu0 0
        %1486 = vmatprep.subr.bf16.mxu0 0
        %1487 = vmatpush1.bf16.msra.mxu0 0
        %1488 = vmatprep.subr.bf16.mxu0 0
        %1489 = vmatpush1.bf16.msra.mxu0 0
        %1490 = vmatprep.mubr.bf16.mxu0 0
        %1491 = vmatmul.mubr.bf16.gmra.mrb[0].mxu0 %v1139
        %v1492 = vpop.f32.mrb[0].mxu0
        %v1493 = vadd.f32 %v1396, %v1492
        %v1494 = vpop.f32.mrb[0].mxu0
        %v1495 = vpop.f32.mrb[0].mxu0
        %v1496 = vadd.f32 %v1399, %v1495
        %v1497 = vpop.f32.mrb[0].mxu0
        %1498 = vmatprep.mubr.bf16.mxu0 0
        %1499 = vmatmul.mubr.bf16.gmra.mrb[0].mxu0 %v1142
        %v1500 = vpop.f32.mrb[0].mxu0
        %v1501 = vadd.f32 %v1404, %v1500
        %v1502 = vpop.f32.mrb[0].mxu0
        %v1503 = vpop.f32.mrb[0].mxu0
        %v1504 = vadd.f32 %v1407, %v1503
        %v1505 = vpop.f32.mrb[0].mxu0
        %1506 = vmatprep.mubr.bf16.mxu0 0
        %1507 = vmatmul.mubr.bf16.gmra.mrb[0].mxu0 %v1145
        %v1508 = vpop.f32.mrb[0].mxu0
        %v1509 = vadd.f32 %v1412, %v1508
        %v1510 = vpop.f32.mrb[0].mxu0
        %v1511 = vpop.f32.mrb[0].mxu0
        %v1512 = vadd.f32 %v1415, %v1511
        %v1513 = vpop.f32.mrb[0].mxu0
        %1514 = vmatprep.mubr.bf16.mxu0 0
        %1515 = vmatmul.mubr.bf16.gmra.mrb[0].mxu0 %v1148
        %v1516 = vpop.f32.mrb[0].mxu0
        %v1517 = vadd.f32 %v1420, %v1516
        %v1518 = vpop.f32.mrb[0].mxu0
        %v1519 = vpop.f32.mrb[0].mxu0
        %v1520 = vadd.f32 %v1423, %v1519
        %v1521 = vpop.f32.mrb[0].mxu0
        %1522 = vmatprep.mubr.bf16.mxu0 0
        %1523 = vmatmul.mubr.bf16.gmra.mrb[0].mxu0 %v1151
        %v1524 = vpop.f32.mrb[0].mxu0
        %v1525 = vadd.f32 %v1428, %v1524
        %v1526 = vpop.f32.mrb[0].mxu0
        %v1527 = vpop.f32.mrb[0].mxu0
        %v1528 = vadd.f32 %v1431, %v1527
        %v1529 = vpop.f32.mrb[0].mxu0
        %1530 = vmatprep.mubr.bf16.mxu0 0
        %1531 = vmatmul.mubr.bf16.gmra.mrb[0].mxu0 %v1154
        %v1532 = vpop.f32.mrb[0].mxu0
        %v1533 = vadd.f32 %v1436, %v1532
        %v1534 = vpop.f32.mrb[0].mxu0
        %v1535 = vpop.f32.mrb[0].mxu0
        %v1536 = vadd.f32 %v1439, %v1535
        %v1537 = vpop.f32.mrb[0].mxu0
        %1538 = vmatprep.mubr.bf16.mxu0 0
        %1539 = vmatmul.mubr.bf16.gmra.mrb[0].mxu0 %v1157
        %v1540 = vpop.f32.mrb[0].mxu0
        %v1541 = vadd.f32 %v1444, %v1540
        %v1542 = vpop.f32.mrb[0].mxu0
        %v1543 = vpop.f32.mrb[0].mxu0
        %v1544 = vadd.f32 %v1447, %v1543
        %v1545 = vpop.f32.mrb[0].mxu0
        %1546 = vmatprep.mubr.bf16.mxu0 0
        %1547 = vmatmul.mubr.bf16.gmra.mrb[0].mxu0 %v1160
        %v1548 = vpop.f32.mrb[0].mxu0
        %v1549 = vadd.f32 %v1452, %v1548
        %v1550 = vpop.f32.mrb[0].mxu0
        %v1551 = vpop.f32.mrb[0].mxu0
        %v1552 = vadd.f32 %v1455, %v1551
        %v1553 = vpop.f32.mrb[0].mxu0
        %1554 = vdwg.mxu0
        %v1556 = vlaneseq
        %v1557 = vshrl.u32 %v1556, 7
        %v1558 = vsub.s32 0, %v1557
        %v1559 = vrot.slane %v1014, %v1558
        %v1561 = vadd.f32 %v1559, %v1493
        %v1562 = vadd.f32 %v1559, %v1496
        %v1563 = vadd.f32 %v1559, %v1501
        %v1564 = vadd.f32 %v1559, %v1504
        %v1565 = vadd.f32 %v1559, %v1509
        %v1566 = vadd.f32 %v1559, %v1512
        %v1567 = vadd.f32 %v1559, %v1517
        %v1568 = vadd.f32 %v1559, %v1520
        %v1569 = vadd.f32 %v1559, %v1525
        %v1570 = vadd.f32 %v1559, %v1528
        %v1571 = vadd.f32 %v1559, %v1533
        %v1572 = vadd.f32 %v1559, %v1536
        %v1573 = vadd.f32 %v1559, %v1541
        %v1574 = vadd.f32 %v1559, %v1544
        %v1575 = vadd.f32 %v1559, %v1549
        %v1576 = vadd.f32 %v1559, %v1552
        %v1578 = vshrl.u32 %v1010, 16
        %v1580 = vshll.u32 %v1010, 16
        %v1582 = vrot.slane %v1580, 1
        %v1583 = vor.u32 %v1578, %v1582
        %v1585 = vshll.u32 %v1011, 16
        %v1587 = vrot.slane %v1585, 1
        %v1588 = vsel %vm1015, %v1583, %v1587
        %v1592 = vrot.slane %v1010, 1
        %v1593 = vrot.slane %v1011, 1
        %v1594 = vsel %vm1136, %v1592, %v1593
        %s1596 = scalar_lea.vmem %s4, 192
        %v1597 = vld [vmem:[%s1596] sm:$0xf]
        %v1598 = vld [vmem:[%s1596 + $0x4] sm:$0xf]
        %v1599 = vld [vmem:[%s1596 + $0x8] sm:$0xf]
        %v1600 = vld [vmem:[%s1596 + $0xc] sm:$0xf]
        %v1601 = vld [vmem:[%s1596 + $0x10] sm:$0xf]
        %v1602 = vld [vmem:[%s1596 + $0x14] sm:$0xf]
        %v1603 = vld [vmem:[%s1596 + $0x18] sm:$0xf]
        %v1604 = vld [vmem:[%s1596 + $0x1c] sm:$0xf]
        %v1605 = vld [vmem:[%s1596 + $0x20] sm:$0xf]
        %v1606 = vld [vmem:[%s1596 + $0x24] sm:$0xf]
        %v1607 = vld [vmem:[%s1596 + $0x28] sm:$0xf]
        %v1608 = vld [vmem:[%s1596 + $0x2c] sm:$0xf]
        %v1609 = vld [vmem:[%s1596 + $0x30] sm:$0xf]
        %v1610 = vld [vmem:[%s1596 + $0x34] sm:$0xf]
        %v1611 = vld [vmem:[%s1596 + $0x38] sm:$0xf]
        %v1612 = vld [vmem:[%s1596 + $0x3c] sm:$0xf]
        %v1613 = vld [vmem:[%s1596 + $0x40] sm:$0xf]
        %v1614 = vld [vmem:[%s1596 + $0x44] sm:$0xf]
        %v1615 = vld [vmem:[%s1596 + $0x48] sm:$0xf]
        %v1616 = vld [vmem:[%s1596 + $0x4c] sm:$0xf]
        %v1617 = vld [vmem:[%s1596 + $0x50] sm:$0xf]
        %v1618 = vld [vmem:[%s1596 + $0x54] sm:$0xf]
        %v1619 = vld [vmem:[%s1596 + $0x58] sm:$0xf]
        %v1620 = vld [vmem:[%s1596 + $0x5c] sm:$0xf]
        %v1621 = vld [vmem:[%s1596 + $0x60] sm:$0xf]
        %v1622 = vld [vmem:[%s1596 + $0x64] sm:$0xf]
        %v1623 = vld [vmem:[%s1596 + $0x68] sm:$0xf]
        %v1624 = vld [vmem:[%s1596 + $0x6c] sm:$0xf]
        %v1625 = vld [vmem:[%s1596 + $0x70] sm:$0xf]
        %v1626 = vld [vmem:[%s1596 + $0x74] sm:$0xf]
        %v1627 = vld [vmem:[%s1596 + $0x78] sm:$0xf]
        %v1628 = vld [vmem:[%s1596 + $0x7c] sm:$0xf]
        %v1629 = vld [vmem:[%s1596 + $0x80] sm:$0xf]
        %v1630 = vld [vmem:[%s1596 + $0x84] sm:$0xf]
        %v1631 = vld [vmem:[%s1596 + $0x88] sm:$0xf]
        %v1632 = vld [vmem:[%s1596 + $0x8c] sm:$0xf]
        %v1633 = vld [vmem:[%s1596 + $0x90] sm:$0xf]
        %v1634 = vld [vmem:[%s1596 + $0x94] sm:$0xf]
        %v1635 = vld [vmem:[%s1596 + $0x98] sm:$0xf]
        %v1636 = vld [vmem:[%s1596 + $0x9c] sm:$0xf]
        %v1637 = vld [vmem:[%s1596 + $0xa0] sm:$0xf]
        %v1638 = vld [vmem:[%s1596 + $0xa4] sm:$0xf]
        %v1639 = vld [vmem:[%s1596 + $0xa8] sm:$0xf]
        %v1640 = vld [vmem:[%s1596 + $0xac] sm:$0xf]
        %v1641 = vld [vmem:[%s1596 + $0xb0] sm:$0xf]
        %v1642 = vld [vmem:[%s1596 + $0xb4] sm:$0xf]
        %v1643 = vld [vmem:[%s1596 + $0xb8] sm:$0xf]
        %v1644 = vld [vmem:[%s1596 + $0xbc] sm:$0xf]
        %v1693 = vunpack.c.l.b16 %v1597
        %v1694 = vunpack.c.l.b16 %v1598
        %v1695 = vunpack.c.l.b16 %v1599
        %v1696 = vunpack.c.l.b16 %v1600
        %v1697 = vunpack.c.l.b16 %v1601
        %v1698 = vunpack.c.l.b16 %v1602
        %v1699 = vunpack.c.l.b16 %v1603
        %v1700 = vunpack.c.l.b16 %v1604
        %v1701 = vunpack.c.l.b16 %v1605
        %v1702 = vunpack.c.l.b16 %v1606
        %v1703 = vunpack.c.l.b16 %v1607
        %v1704 = vunpack.c.l.b16 %v1608
        %v1705 = vunpack.c.l.b16 %v1609
        %v1706 = vunpack.c.l.b16 %v1610
        %v1707 = vunpack.c.l.b16 %v1611
        %v1708 = vunpack.c.l.b16 %v1612
        %v1709 = vunpack.c.l.b16 %v1613
        %v1710 = vunpack.c.l.b16 %v1614
        %v1711 = vunpack.c.l.b16 %v1615
        %v1712 = vunpack.c.l.b16 %v1616
        %v1713 = vunpack.c.l.b16 %v1617
        %v1714 = vunpack.c.l.b16 %v1618
        %v1715 = vunpack.c.l.b16 %v1619
        %v1716 = vunpack.c.l.b16 %v1620
        %v1717 = vunpack.c.l.b16 %v1621
        %v1718 = vunpack.c.l.b16 %v1622
        %v1719 = vunpack.c.l.b16 %v1623
        %v1720 = vunpack.c.l.b16 %v1624
        %v1721 = vunpack.c.l.b16 %v1625
        %v1722 = vunpack.c.l.b16 %v1626
        %v1723 = vunpack.c.l.b16 %v1627
        %v1724 = vunpack.c.l.b16 %v1628
        %v1725 = vunpack.c.l.b16 %v1629
        %v1726 = vunpack.c.l.b16 %v1630
        %v1727 = vunpack.c.l.b16 %v1631
        %v1728 = vunpack.c.l.b16 %v1632
        %v1729 = vunpack.c.l.b16 %v1633
        %v1730 = vunpack.c.l.b16 %v1634
        %v1731 = vunpack.c.l.b16 %v1635
        %v1732 = vunpack.c.l.b16 %v1636
        %v1733 = vunpack.c.l.b16 %v1637
        %v1734 = vunpack.c.l.b16 %v1638
        %v1735 = vunpack.c.l.b16 %v1639
        %v1736 = vunpack.c.l.b16 %v1640
        %v1737 = vunpack.c.l.b16 %v1641
        %v1738 = vunpack.c.l.b16 %v1642
        %v1739 = vunpack.c.l.b16 %v1643
        %v1740 = vunpack.c.l.b16 %v1644
        %v1741 = vpack.c.b16 %v1694, %v1693
        %v1742 = vpack.c.b16 %v1696, %v1695
        %v1743 = vpack.c.b16 %v1698, %v1697
        %v1744 = vpack.c.b16 %v1700, %v1699
        %v1745 = vpack.c.b16 %v1702, %v1701
        %v1746 = vpack.c.b16 %v1704, %v1703
        %v1747 = vpack.c.b16 %v1706, %v1705
        %v1748 = vpack.c.b16 %v1708, %v1707
        %v1749 = vpack.c.b16 %v1710, %v1709
        %v1750 = vpack.c.b16 %v1712, %v1711
        %v1751 = vpack.c.b16 %v1714, %v1713
        %v1752 = vpack.c.b16 %v1716, %v1715
        %v1753 = vpack.c.b16 %v1718, %v1717
        %v1754 = vpack.c.b16 %v1720, %v1719
        %v1755 = vpack.c.b16 %v1722, %v1721
        %v1756 = vpack.c.b16 %v1724, %v1723
        %v1757 = vpack.c.b16 %v1726, %v1725
        %v1758 = vpack.c.b16 %v1728, %v1727
        %v1759 = vpack.c.b16 %v1730, %v1729
        %v1760 = vpack.c.b16 %v1732, %v1731
        %v1761 = vpack.c.b16 %v1734, %v1733
        %v1762 = vpack.c.b16 %v1736, %v1735
        %v1763 = vpack.c.b16 %v1738, %v1737
        %v1764 = vpack.c.b16 %v1740, %v1739
        %1789 = vmatprep.subr.bf16.mxu0 0
        %1790 = vmatpush1.bf16.msra.mxu0 %v1741
        %1791 = vmatprep.subr.bf16.mxu0 0
        %1792 = vmatpush1.bf16.msra.mxu0 %v1742
        %1793 = vmatprep.subr.bf16.mxu0 0
        %1794 = vmatpush1.bf16.msra.mxu0 %v1743
        %1795 = vmatprep.subr.bf16.mxu0 0
        %1796 = vmatpush1.bf16.msra.mxu0 %v1744
        %1797 = vmatprep.subr.bf16.mxu0 0
        %1798 = vmatpush1.bf16.msra.mxu0 %v1745
        %1799 = vmatprep.subr.bf16.mxu0 0
        %1800 = vmatpush1.bf16.msra.mxu0 %v1746
        %1801 = vmatprep.subr.bf16.mxu0 0
        %1802 = vmatpush1.bf16.msra.mxu0 %v1747
        %1803 = vmatprep.subr.bf16.mxu0 0
        %1804 = vmatpush1.bf16.msra.mxu0 %v1748
        %1805 = vmatprep.subr.bf16.mxu0 0
        %1806 = vmatpush1.bf16.msra.mxu0 %v1749
        %1807 = vmatprep.subr.bf16.mxu0 0
        %1808 = vmatpush1.bf16.msra.mxu0 %v1750
        %1809 = vmatprep.subr.bf16.mxu0 0
        %1810 = vmatpush1.bf16.msra.mxu0 %v1751
        %1811 = vmatprep.subr.bf16.mxu0 0
        %1812 = vmatpush1.bf16.msra.mxu0 %v1752
        %1813 = vmatprep.subr.bf16.mxu0 0
        %1814 = vmatpush1.bf16.msra.mxu0 %v1753
        %1815 = vmatprep.subr.bf16.mxu0 0
        %1816 = vmatpush1.bf16.msra.mxu0 %v1754
        %1817 = vmatprep.subr.bf16.mxu0 0
        %1818 = vmatpush1.bf16.msra.mxu0 %v1755
        %1819 = vmatprep.subr.bf16.mxu0 0
        %1820 = vmatpush1.bf16.msra.mxu0 %v1756
        %1821 = vmatprep.mubr.bf16.mxu0 %v1039
        %1822 = vmatmul.mubr.bf16.gmra.mrb[0].mxu0 %v996
        %v1823 = vpop.f32.mrb[0].mxu0
        %v1824 = vadd.f32 0.0, %v1823
        %v1825 = vpop.f32.mrb[0].mxu0
        %v1826 = vpop.f32.mrb[0].mxu0
        %v1827 = vadd.f32 0.0, %v1826
        %v1828 = vpop.f32.mrb[0].mxu0
        %1829 = vmatprep.mubr.bf16.mxu0 %v1051
        %1830 = vmatmul.mubr.bf16.gmra.mrb[0].mxu0 %v998
        %v1831 = vpop.f32.mrb[0].mxu0
        %v1832 = vadd.f32 0.0, %v1831
        %v1833 = vpop.f32.mrb[0].mxu0
        %v1834 = vpop.f32.mrb[0].mxu0
        %v1835 = vadd.f32 0.0, %v1834
        %v1836 = vpop.f32.mrb[0].mxu0
        %1837 = vmatprep.mubr.bf16.mxu0 %v1063
        %1838 = vmatmul.mubr.bf16.gmra.mrb[0].mxu0 %v1000
        %v1839 = vpop.f32.mrb[0].mxu0
        %v1840 = vadd.f32 0.0, %v1839
        %v1841 = vpop.f32.mrb[0].mxu0
        %v1842 = vpop.f32.mrb[0].mxu0
        %v1843 = vadd.f32 0.0, %v1842
        %v1844 = vpop.f32.mrb[0].mxu0
        %1845 = vmatprep.mubr.bf16.mxu0 %v1075
        %1846 = vmatmul.mubr.bf16.gmra.mrb[0].mxu0 %v1002
        %v1847 = vpop.f32.mrb[0].mxu0
        %v1848 = vadd.f32 0.0, %v1847
        %v1849 = vpop.f32.mrb[0].mxu0
        %v1850 = vpop.f32.mrb[0].mxu0
        %v1851 = vadd.f32 0.0, %v1850
        %v1852 = vpop.f32.mrb[0].mxu0
        %1853 = vmatprep.mubr.bf16.mxu0 %v1087
        %1854 = vmatmul.mubr.bf16.gmra.mrb[0].mxu0 %v1004
        %v1855 = vpop.f32.mrb[0].mxu0
        %v1856 = vadd.f32 0.0, %v1855
        %v1857 = vpop.f32.mrb[0].mxu0
        %v1858 = vpop.f32.mrb[0].mxu0
        %v1859 = vadd.f32 0.0, %v1858
        %v1860 = vpop.f32.mrb[0].mxu0
        %1861 = vmatprep.mubr.bf16.mxu0 %v1099
        %1862 = vmatmul.mubr.bf16.gmra.mrb[0].mxu0 %v1006
        %v1863 = vpop.f32.mrb[0].mxu0
        %v1864 = vadd.f32 0.0, %v1863
        %v1865 = vpop.f32.mrb[0].mxu0
        %v1866 = vpop.f32.mrb[0].mxu0
        %v1867 = vadd.f32 0.0, %v1866
        %v1868 = vpop.f32.mrb[0].mxu0
        %1869 = vmatprep.mubr.bf16.mxu0 %v1111
        %1870 = vmatmul.mubr.bf16.gmra.mrb[0].mxu0 %v1008
        %v1871 = vpop.f32.mrb[0].mxu0
        %v1872 = vadd.f32 0.0, %v1871
        %v1873 = vpop.f32.mrb[0].mxu0
        %v1874 = vpop.f32.mrb[0].mxu0
        %v1875 = vadd.f32 0.0, %v1874
        %v1876 = vpop.f32.mrb[0].mxu0
        %1877 = vmatprep.mubr.bf16.mxu0 %v1588
        %1878 = vmatmul.mubr.bf16.gmra.mrb[0].mxu0 %v1010
        %v1879 = vpop.f32.mrb[0].mxu0
        %v1880 = vadd.f32 0.0, %v1879
        %v1881 = vpop.f32.mrb[0].mxu0
        %v1882 = vpop.f32.mrb[0].mxu0
        %v1883 = vadd.f32 0.0, %v1882
        %v1884 = vpop.f32.mrb[0].mxu0
        %1885 = vdwg.mxu0
        %1886 = vmatprep.subr.bf16.mxu0 0
        %1887 = vmatpush1.bf16.msra.mxu0 %v1757
        %1888 = vmatprep.subr.bf16.mxu0 0
        %1889 = vmatpush1.bf16.msra.mxu0 %v1758
        %1890 = vmatprep.subr.bf16.mxu0 0
        %1891 = vmatpush1.bf16.msra.mxu0 %v1759
        %1892 = vmatprep.subr.bf16.mxu0 0
        %1893 = vmatpush1.bf16.msra.mxu0 %v1760
        %1894 = vmatprep.subr.bf16.mxu0 0
        %1895 = vmatpush1.bf16.msra.mxu0 %v1761
        %1896 = vmatprep.subr.bf16.mxu0 0
        %1897 = vmatpush1.bf16.msra.mxu0 %v1762
        %1898 = vmatprep.subr.bf16.mxu0 0
        %1899 = vmatpush1.bf16.msra.mxu0 %v1763
        %1900 = vmatprep.subr.bf16.mxu0 0
        %1901 = vmatpush1.bf16.msra.mxu0 %v1764
        %1902 = vmatprep.subr.bf16.mxu0 0
        %1903 = vmatpush1.bf16.msra.mxu0 0
        %1904 = vmatprep.subr.bf16.mxu0 0
        %1905 = vmatpush1.bf16.msra.mxu0 0
        %1906 = vmatprep.subr.bf16.mxu0 0
        %1907 = vmatpush1.bf16.msra.mxu0 0
        %1908 = vmatprep.subr.bf16.mxu0 0
        %1909 = vmatpush1.bf16.msra.mxu0 0
        %1910 = vmatprep.subr.bf16.mxu0 0
        %1911 = vmatpush1.bf16.msra.mxu0 0
        %1912 = vmatprep.subr.bf16.mxu0 0
        %1913 = vmatpush1.bf16.msra.mxu0 0
        %1914 = vmatprep.subr.bf16.mxu0 0
        %1915 = vmatpush1.bf16.msra.mxu0 0
        %1916 = vmatprep.subr.bf16.mxu0 0
        %1917 = vmatpush1.bf16.msra.mxu0 0
        %1918 = vmatprep.mubr.bf16.mxu0 0
        %1919 = vmatmul.mubr.bf16.gmra.mrb[0].mxu0 %v1142
        %v1920 = vpop.f32.mrb[0].mxu0
        %v1921 = vadd.f32 %v1824, %v1920
        %v1922 = vpop.f32.mrb[0].mxu0
        %v1923 = vpop.f32.mrb[0].mxu0
        %v1924 = vadd.f32 %v1827, %v1923
        %v1925 = vpop.f32.mrb[0].mxu0
        %1926 = vmatprep.mubr.bf16.mxu0 0
        %1927 = vmatmul.mubr.bf16.gmra.mrb[0].mxu0 %v1145
        %v1928 = vpop.f32.mrb[0].mxu0
        %v1929 = vadd.f32 %v1832, %v1928
        %v1930 = vpop.f32.mrb[0].mxu0
        %v1931 = vpop.f32.mrb[0].mxu0
        %v1932 = vadd.f32 %v1835, %v1931
        %v1933 = vpop.f32.mrb[0].mxu0
        %1934 = vmatprep.mubr.bf16.mxu0 0
        %1935 = vmatmul.mubr.bf16.gmra.mrb[0].mxu0 %v1148
        %v1936 = vpop.f32.mrb[0].mxu0
        %v1937 = vadd.f32 %v1840, %v1936
        %v1938 = vpop.f32.mrb[0].mxu0
        %v1939 = vpop.f32.mrb[0].mxu0
        %v1940 = vadd.f32 %v1843, %v1939
        %v1941 = vpop.f32.mrb[0].mxu0
        %1942 = vmatprep.mubr.bf16.mxu0 0
        %1943 = vmatmul.mubr.bf16.gmra.mrb[0].mxu0 %v1151
        %v1944 = vpop.f32.mrb[0].mxu0
        %v1945 = vadd.f32 %v1848, %v1944
        %v1946 = vpop.f32.mrb[0].mxu0
        %v1947 = vpop.f32.mrb[0].mxu0
        %v1948 = vadd.f32 %v1851, %v1947
        %v1949 = vpop.f32.mrb[0].mxu0
        %1950 = vmatprep.mubr.bf16.mxu0 0
        %1951 = vmatmul.mubr.bf16.gmra.mrb[0].mxu0 %v1154
        %v1952 = vpop.f32.mrb[0].mxu0
        %v1953 = vadd.f32 %v1856, %v1952
        %v1954 = vpop.f32.mrb[0].mxu0
        %v1955 = vpop.f32.mrb[0].mxu0
        %v1956 = vadd.f32 %v1859, %v1955
        %v1957 = vpop.f32.mrb[0].mxu0
        %1958 = vmatprep.mubr.bf16.mxu0 0
        %1959 = vmatmul.mubr.bf16.gmra.mrb[0].mxu0 %v1157
        %v1960 = vpop.f32.mrb[0].mxu0
        %v1961 = vadd.f32 %v1864, %v1960
        %v1962 = vpop.f32.mrb[0].mxu0
        %v1963 = vpop.f32.mrb[0].mxu0
        %v1964 = vadd.f32 %v1867, %v1963
        %v1965 = vpop.f32.mrb[0].mxu0
        %1966 = vmatprep.mubr.bf16.mxu0 0
        %1967 = vmatmul.mubr.bf16.gmra.mrb[0].mxu0 %v1160
        %v1968 = vpop.f32.mrb[0].mxu0
        %v1969 = vadd.f32 %v1872, %v1968
        %v1970 = vpop.f32.mrb[0].mxu0
        %v1971 = vpop.f32.mrb[0].mxu0
        %v1972 = vadd.f32 %v1875, %v1971
        %v1973 = vpop.f32.mrb[0].mxu0
        %1974 = vmatprep.mubr.bf16.mxu0 0
        %1975 = vmatmul.mubr.bf16.gmra.mrb[0].mxu0 %v1594
        %v1976 = vpop.f32.mrb[0].mxu0
        %v1977 = vadd.f32 %v1880, %v1976
        %v1978 = vpop.f32.mrb[0].mxu0
        %v1979 = vpop.f32.mrb[0].mxu0
        %v1980 = vadd.f32 %v1883, %v1979
        %v1981 = vpop.f32.mrb[0].mxu0
        %1982 = vdwg.mxu0
        %v1983 = vadd.f32 %v1561, %v1921
        %v1984 = vadd.f32 %v1562, %v1924
        %v1985 = vadd.f32 %v1563, %v1929
        %v1986 = vadd.f32 %v1564, %v1932
        %v1987 = vadd.f32 %v1565, %v1937
        %v1988 = vadd.f32 %v1566, %v1940
        %v1989 = vadd.f32 %v1567, %v1945
        %v1990 = vadd.f32 %v1568, %v1948
        %v1991 = vadd.f32 %v1569, %v1953
        %v1992 = vadd.f32 %v1570, %v1956
        %v1993 = vadd.f32 %v1571, %v1961
        %v1994 = vadd.f32 %v1572, %v1964
        %v1995 = vadd.f32 %v1573, %v1969
        %v1996 = vadd.f32 %v1574, %v1972
        %v1997 = vadd.f32 %v1575, %v1977
        %v1998 = vadd.f32 %v1576, %v1980
        %v2000 = vshrl.u32 %v1012, 16
        %v2002 = vshll.u32 %v1012, 16
        %v2004 = vrot.slane %v2002, 1
        %v2005 = vor.u32 %v2000, %v2004
        %v2007 = vshll.u32 %v1013, 16
        %v2009 = vrot.slane %v2007, 1
        %v2010 = vsel %vm1015, %v2005, %v2009
        %v2014 = vrot.slane %v1012, 1
        %v2015 = vrot.slane %v1013, 1
        %v2016 = vsel %vm1136, %v2014, %v2015
        %s2018 = scalar_lea.vmem %s4, 384
        %v2019 = vld [vmem:[%s2018] sm:$0xf]
        %v2020 = vld [vmem:[%s2018 + $0x4] sm:$0xf]
        %v2021 = vld [vmem:[%s2018 + $0x8] sm:$0xf]
        %v2022 = vld [vmem:[%s2018 + $0xc] sm:$0xf]
        %v2023 = vld [vmem:[%s2018 + $0x10] sm:$0xf]
        %v2024 = vld [vmem:[%s2018 + $0x14] sm:$0xf]
        %v2025 = vld [vmem:[%s2018 + $0x18] sm:$0xf]
        %v2026 = vld [vmem:[%s2018 + $0x1c] sm:$0xf]
        %v2027 = vld [vmem:[%s2018 + $0x20] sm:$0xf]
        %v2028 = vld [vmem:[%s2018 + $0x24] sm:$0xf]
        %v2029 = vld [vmem:[%s2018 + $0x28] sm:$0xf]
        %v2030 = vld [vmem:[%s2018 + $0x2c] sm:$0xf]
        %v2031 = vld [vmem:[%s2018 + $0x30] sm:$0xf]
        %v2032 = vld [vmem:[%s2018 + $0x34] sm:$0xf]
        %v2033 = vld [vmem:[%s2018 + $0x38] sm:$0xf]
        %v2034 = vld [vmem:[%s2018 + $0x3c] sm:$0xf]
        %v2035 = vld [vmem:[%s2018 + $0x40] sm:$0xf]
        %v2036 = vld [vmem:[%s2018 + $0x44] sm:$0xf]
        %v2037 = vld [vmem:[%s2018 + $0x48] sm:$0xf]
        %v2038 = vld [vmem:[%s2018 + $0x4c] sm:$0xf]
        %v2039 = vld [vmem:[%s2018 + $0x50] sm:$0xf]
        %v2040 = vld [vmem:[%s2018 + $0x54] sm:$0xf]
        %v2041 = vld [vmem:[%s2018 + $0x58] sm:$0xf]
        %v2042 = vld [vmem:[%s2018 + $0x5c] sm:$0xf]
        %v2043 = vld [vmem:[%s2018 + $0x60] sm:$0xf]
        %v2044 = vld [vmem:[%s2018 + $0x64] sm:$0xf]
        %v2045 = vld [vmem:[%s2018 + $0x68] sm:$0xf]
        %v2046 = vld [vmem:[%s2018 + $0x6c] sm:$0xf]
        %v2047 = vld [vmem:[%s2018 + $0x70] sm:$0xf]
        %v2048 = vld [vmem:[%s2018 + $0x74] sm:$0xf]
        %v2049 = vld [vmem:[%s2018 + $0x78] sm:$0xf]
        %v2050 = vld [vmem:[%s2018 + $0x7c] sm:$0xf]
        %v2051 = vld [vmem:[%s2018 + $0x80] sm:$0xf]
        %v2052 = vld [vmem:[%s2018 + $0x84] sm:$0xf]
        %v2053 = vld [vmem:[%s2018 + $0x88] sm:$0xf]
        %v2054 = vld [vmem:[%s2018 + $0x8c] sm:$0xf]
        %v2055 = vld [vmem:[%s2018 + $0x90] sm:$0xf]
        %v2056 = vld [vmem:[%s2018 + $0x94] sm:$0xf]
        %v2057 = vld [vmem:[%s2018 + $0x98] sm:$0xf]
        %v2058 = vld [vmem:[%s2018 + $0x9c] sm:$0xf]
        %v2059 = vld [vmem:[%s2018 + $0xa0] sm:$0xf]
        %v2060 = vld [vmem:[%s2018 + $0xa4] sm:$0xf]
        %v2061 = vld [vmem:[%s2018 + $0xa8] sm:$0xf]
        %v2062 = vld [vmem:[%s2018 + $0xac] sm:$0xf]
        %v2063 = vld [vmem:[%s2018 + $0xb0] sm:$0xf]
        %v2064 = vld [vmem:[%s2018 + $0xb4] sm:$0xf]
        %v2065 = vld [vmem:[%s2018 + $0xb8] sm:$0xf]
        %v2066 = vld [vmem:[%s2018 + $0xbc] sm:$0xf]
        %v2115 = vunpack.c.l.b16 %v2019
        %v2116 = vunpack.c.l.b16 %v2020
        %v2117 = vunpack.c.l.b16 %v2021
        %v2118 = vunpack.c.l.b16 %v2022
        %v2119 = vunpack.c.l.b16 %v2023
        %v2120 = vunpack.c.l.b16 %v2024
        %v2121 = vunpack.c.l.b16 %v2025
        %v2122 = vunpack.c.l.b16 %v2026
        %v2123 = vunpack.c.l.b16 %v2027
        %v2124 = vunpack.c.l.b16 %v2028
        %v2125 = vunpack.c.l.b16 %v2029
        %v2126 = vunpack.c.l.b16 %v2030
        %v2127 = vunpack.c.l.b16 %v2031
        %v2128 = vunpack.c.l.b16 %v2032
        %v2129 = vunpack.c.l.b16 %v2033
        %v2130 = vunpack.c.l.b16 %v2034
        %v2131 = vunpack.c.l.b16 %v2035
        %v2132 = vunpack.c.l.b16 %v2036
        %v2133 = vunpack.c.l.b16 %v2037
        %v2134 = vunpack.c.l.b16 %v2038
        %v2135 = vunpack.c.l.b16 %v2039
        %v2136 = vunpack.c.l.b16 %v2040
        %v2137 = vunpack.c.l.b16 %v2041
        %v2138 = vunpack.c.l.b16 %v2042
        %v2139 = vunpack.c.l.b16 %v2043
        %v2140 = vunpack.c.l.b16 %v2044
        %v2141 = vunpack.c.l.b16 %v2045
        %v2142 = vunpack.c.l.b16 %v2046
        %v2143 = vunpack.c.l.b16 %v2047
        %v2144 = vunpack.c.l.b16 %v2048
        %v2145 = vunpack.c.l.b16 %v2049
        %v2146 = vunpack.c.l.b16 %v2050
        %v2147 = vunpack.c.l.b16 %v2051
        %v2148 = vunpack.c.l.b16 %v2052
        %v2149 = vunpack.c.l.b16 %v2053
        %v2150 = vunpack.c.l.b16 %v2054
        %v2151 = vunpack.c.l.b16 %v2055
        %v2152 = vunpack.c.l.b16 %v2056
        %v2153 = vunpack.c.l.b16 %v2057
        %v2154 = vunpack.c.l.b16 %v2058
        %v2155 = vunpack.c.l.b16 %v2059
        %v2156 = vunpack.c.l.b16 %v2060
        %v2157 = vunpack.c.l.b16 %v2061
        %v2158 = vunpack.c.l.b16 %v2062
        %v2159 = vunpack.c.l.b16 %v2063
        %v2160 = vunpack.c.l.b16 %v2064
        %v2161 = vunpack.c.l.b16 %v2065
        %v2162 = vunpack.c.l.b16 %v2066
        %v2163 = vpack.c.b16 %v2116, %v2115
        %v2164 = vpack.c.b16 %v2118, %v2117
        %v2165 = vpack.c.b16 %v2120, %v2119
        %v2166 = vpack.c.b16 %v2122, %v2121
        %v2167 = vpack.c.b16 %v2124, %v2123
        %v2168 = vpack.c.b16 %v2126, %v2125
        %v2169 = vpack.c.b16 %v2128, %v2127
        %v2170 = vpack.c.b16 %v2130, %v2129
        %v2171 = vpack.c.b16 %v2132, %v2131
        %v2172 = vpack.c.b16 %v2134, %v2133
        %v2173 = vpack.c.b16 %v2136, %v2135
        %v2174 = vpack.c.b16 %v2138, %v2137
        %v2175 = vpack.c.b16 %v2140, %v2139
        %v2176 = vpack.c.b16 %v2142, %v2141
        %v2177 = vpack.c.b16 %v2144, %v2143
        %v2178 = vpack.c.b16 %v2146, %v2145
        %v2179 = vpack.c.b16 %v2148, %v2147
        %v2180 = vpack.c.b16 %v2150, %v2149
        %v2181 = vpack.c.b16 %v2152, %v2151
        %v2182 = vpack.c.b16 %v2154, %v2153
        %v2183 = vpack.c.b16 %v2156, %v2155
        %v2184 = vpack.c.b16 %v2158, %v2157
        %v2185 = vpack.c.b16 %v2160, %v2159
        %v2186 = vpack.c.b16 %v2162, %v2161
        %2211 = vmatprep.subr.bf16.mxu0 0
        %2212 = vmatpush1.bf16.msra.mxu0 %v2163
        %2213 = vmatprep.subr.bf16.mxu0 0
        %2214 = vmatpush1.bf16.msra.mxu0 %v2164
        %2215 = vmatprep.subr.bf16.mxu0 0
        %2216 = vmatpush1.bf16.msra.mxu0 %v2165
        %2217 = vmatprep.subr.bf16.mxu0 0
        %2218 = vmatpush1.bf16.msra.mxu0 %v2166
        %2219 = vmatprep.subr.bf16.mxu0 0
        %2220 = vmatpush1.bf16.msra.mxu0 %v2167
        %2221 = vmatprep.subr.bf16.mxu0 0
        %2222 = vmatpush1.bf16.msra.mxu0 %v2168
        %2223 = vmatprep.subr.bf16.mxu0 0
        %2224 = vmatpush1.bf16.msra.mxu0 %v2169
        %2225 = vmatprep.subr.bf16.mxu0 0
        %2226 = vmatpush1.bf16.msra.mxu0 %v2170
        %2227 = vmatprep.subr.bf16.mxu0 0
        %2228 = vmatpush1.bf16.msra.mxu0 %v2171
        %2229 = vmatprep.subr.bf16.mxu0 0
        %2230 = vmatpush1.bf16.msra.mxu0 %v2172
        %2231 = vmatprep.subr.bf16.mxu0 0
        %2232 = vmatpush1.bf16.msra.mxu0 %v2173
        %2233 = vmatprep.subr.bf16.mxu0 0
        %2234 = vmatpush1.bf16.msra.mxu0 %v2174
        %2235 = vmatprep.subr.bf16.mxu0 0
        %2236 = vmatpush1.bf16.msra.mxu0 %v2175
        %2237 = vmatprep.subr.bf16.mxu0 0
        %2238 = vmatpush1.bf16.msra.mxu0 %v2176
        %2239 = vmatprep.subr.bf16.mxu0 0
        %2240 = vmatpush1.bf16.msra.mxu0 %v2177
        %2241 = vmatprep.subr.bf16.mxu0 0
        %2242 = vmatpush1.bf16.msra.mxu0 %v2178
        %2243 = vmatprep.mubr.bf16.mxu0 %v1051
        %2244 = vmatmul.mubr.bf16.gmra.mrb[0].mxu0 %v998
        %v2245 = vpop.f32.mrb[0].mxu0
        %v2246 = vadd.f32 0.0, %v2245
        %v2247 = vpop.f32.mrb[0].mxu0
        %v2248 = vpop.f32.mrb[0].mxu0
        %v2249 = vadd.f32 0.0, %v2248
        %v2250 = vpop.f32.mrb[0].mxu0
        %2251 = vmatprep.mubr.bf16.mxu0 %v1063
        %2252 = vmatmul.mubr.bf16.gmra.mrb[0].mxu0 %v1000
        %v2253 = vpop.f32.mrb[0].mxu0
        %v2254 = vadd.f32 0.0, %v2253
        %v2255 = vpop.f32.mrb[0].mxu0
        %v2256 = vpop.f32.mrb[0].mxu0
        %v2257 = vadd.f32 0.0, %v2256
        %v2258 = vpop.f32.mrb[0].mxu0
        %2259 = vmatprep.mubr.bf16.mxu0 %v1075
        %2260 = vmatmul.mubr.bf16.gmra.mrb[0].mxu0 %v1002
        %v2261 = vpop.f32.mrb[0].mxu0
        %v2262 = vadd.f32 0.0, %v2261
        %v2263 = vpop.f32.mrb[0].mxu0
        %v2264 = vpop.f32.mrb[0].mxu0
        %v2265 = vadd.f32 0.0, %v2264
        %v2266 = vpop.f32.mrb[0].mxu0
        %2267 = vmatprep.mubr.bf16.mxu0 %v1087
        %2268 = vmatmul.mubr.bf16.gmra.mrb[0].mxu0 %v1004
        %v2269 = vpop.f32.mrb[0].mxu0
        %v2270 = vadd.f32 0.0, %v2269
        %v2271 = vpop.f32.mrb[0].mxu0
        %v2272 = vpop.f32.mrb[0].mxu0
        %v2273 = vadd.f32 0.0, %v2272
        %v2274 = vpop.f32.mrb[0].mxu0
        %2275 = vmatprep.mubr.bf16.mxu0 %v1099
        %2276 = vmatmul.mubr.bf16.gmra.mrb[0].mxu0 %v1006
        %v2277 = vpop.f32.mrb[0].mxu0
        %v2278 = vadd.f32 0.0, %v2277
        %v2279 = vpop.f32.mrb[0].mxu0
        %v2280 = vpop.f32.mrb[0].mxu0
        %v2281 = vadd.f32 0.0, %v2280
        %v2282 = vpop.f32.mrb[0].mxu0
        %2283 = vmatprep.mubr.bf16.mxu0 %v1111
        %2284 = vmatmul.mubr.bf16.gmra.mrb[0].mxu0 %v1008
        %v2285 = vpop.f32.mrb[0].mxu0
        %v2286 = vadd.f32 0.0, %v2285
        %v2287 = vpop.f32.mrb[0].mxu0
        %v2288 = vpop.f32.mrb[0].mxu0
        %v2289 = vadd.f32 0.0, %v2288
        %v2290 = vpop.f32.mrb[0].mxu0
        %2291 = vmatprep.mubr.bf16.mxu0 %v1588
        %2292 = vmatmul.mubr.bf16.gmra.mrb[0].mxu0 %v1010
        %v2293 = vpop.f32.mrb[0].mxu0
        %v2294 = vadd.f32 0.0, %v2293
        %v2295 = vpop.f32.mrb[0].mxu0
        %v2296 = vpop.f32.mrb[0].mxu0
        %v2297 = vadd.f32 0.0, %v2296
        %v2298 = vpop.f32.mrb[0].mxu0
        %2299 = vmatprep.mubr.bf16.mxu0 %v2010
        %2300 = vmatmul.mubr.bf16.gmra.mrb[0].mxu0 %v1012
        %v2301 = vpop.f32.mrb[0].mxu0
        %v2302 = vadd.f32 0.0, %v2301
        %v2303 = vpop.f32.mrb[0].mxu0
        %v2304 = vpop.f32.mrb[0].mxu0
        %v2305 = vadd.f32 0.0, %v2304
        %v2306 = vpop.f32.mrb[0].mxu0
        %2307 = vdwg.mxu0
        %2308 = vmatprep.subr.bf16.mxu0 0
        %2309 = vmatpush1.bf16.msra.mxu0 %v2179
        %2310 = vmatprep.subr.bf16.mxu0 0
        %2311 = vmatpush1.bf16.msra.mxu0 %v2180
        %2312 = vmatprep.subr.bf16.mxu0 0
        %2313 = vmatpush1.bf16.msra.mxu0 %v2181
        %2314 = vmatprep.subr.bf16.mxu0 0
        %2315 = vmatpush1.bf16.msra.mxu0 %v2182
        %2316 = vmatprep.subr.bf16.mxu0 0
        %2317 = vmatpush1.bf16.msra.mxu0 %v2183
        %2318 = vmatprep.subr.bf16.mxu0 0
        %2319 = vmatpush1.bf16.msra.mxu0 %v2184
        %2320 = vmatprep.subr.bf16.mxu0 0
        %2321 = vmatpush1.bf16.msra.mxu0 %v2185
        %2322 = vmatprep.subr.bf16.mxu0 0
        %2323 = vmatpush1.bf16.msra.mxu0 %v2186
        %2324 = vmatprep.subr.bf16.mxu0 0
        %2325 = vmatpush1.bf16.msra.mxu0 0
        %2326 = vmatprep.subr.bf16.mxu0 0
        %2327 = vmatpush1.bf16.msra.mxu0 0
        %2328 = vmatprep.subr.bf16.mxu0 0
        %2329 = vmatpush1.bf16.msra.mxu0 0
        %2330 = vmatprep.subr.bf16.mxu0 0
        %2331 = vmatpush1.bf16.msra.mxu0 0
        %2332 = vmatprep.subr.bf16.mxu0 0
        %2333 = vmatpush1.bf16.msra.mxu0 0
        %2334 = vmatprep.subr.bf16.mxu0 0
        %2335 = vmatpush1.bf16.msra.mxu0 0
        %2336 = vmatprep.subr.bf16.mxu0 0
        %2337 = vmatpush1.bf16.msra.mxu0 0
        %2338 = vmatprep.subr.bf16.mxu0 0
        %2339 = vmatpush1.bf16.msra.mxu0 0
        %2340 = vmatprep.mubr.bf16.mxu0 0
        %2341 = vmatmul.mubr.bf16.gmra.mrb[0].mxu0 %v1145
        %v2342 = vpop.f32.mrb[0].mxu0
        %v2343 = vadd.f32 %v2246, %v2342
        %v2344 = vpop.f32.mrb[0].mxu0
        %v2345 = vpop.f32.mrb[0].mxu0
        %v2346 = vadd.f32 %v2249, %v2345
        %v2347 = vpop.f32.mrb[0].mxu0
        %2348 = vmatprep.mubr.bf16.mxu0 0
        %2349 = vmatmul.mubr.bf16.gmra.mrb[0].mxu0 %v1148
        %v2350 = vpop.f32.mrb[0].mxu0
        %v2351 = vadd.f32 %v2254, %v2350
        %v2352 = vpop.f32.mrb[0].mxu0
        %v2353 = vpop.f32.mrb[0].mxu0
        %v2354 = vadd.f32 %v2257, %v2353
        %v2355 = vpop.f32.mrb[0].mxu0
        %2356 = vmatprep.mubr.bf16.mxu0 0
        %2357 = vmatmul.mubr.bf16.gmra.mrb[0].mxu0 %v1151
        %v2358 = vpop.f32.mrb[0].mxu0
        %v2359 = vadd.f32 %v2262, %v2358
        %v2360 = vpop.f32.mrb[0].mxu0
        %v2361 = vpop.f32.mrb[0].mxu0
        %v2362 = vadd.f32 %v2265, %v2361
        %v2363 = vpop.f32.mrb[0].mxu0
        %2364 = vmatprep.mubr.bf16.mxu0 0
        %2365 = vmatmul.mubr.bf16.gmra.mrb[0].mxu0 %v1154
        %v2366 = vpop.f32.mrb[0].mxu0
        %v2367 = vadd.f32 %v2270, %v2366
        %v2368 = vpop.f32.mrb[0].mxu0
        %v2369 = vpop.f32.mrb[0].mxu0
        %v2370 = vadd.f32 %v2273, %v2369
        %v2371 = vpop.f32.mrb[0].mxu0
        %2372 = vmatprep.mubr.bf16.mxu0 0
        %2373 = vmatmul.mubr.bf16.gmra.mrb[0].mxu0 %v1157
        %v2374 = vpop.f32.mrb[0].mxu0
        %v2375 = vadd.f32 %v2278, %v2374
        %v2376 = vpop.f32.mrb[0].mxu0
        %v2377 = vpop.f32.mrb[0].mxu0
        %v2378 = vadd.f32 %v2281, %v2377
        %v2379 = vpop.f32.mrb[0].mxu0
        %2380 = vmatprep.mubr.bf16.mxu0 0
        %2381 = vmatmul.mubr.bf16.gmra.mrb[0].mxu0 %v1160
        %v2382 = vpop.f32.mrb[0].mxu0
        %v2383 = vadd.f32 %v2286, %v2382
        %v2384 = vpop.f32.mrb[0].mxu0
        %v2385 = vpop.f32.mrb[0].mxu0
        %v2386 = vadd.f32 %v2289, %v2385
        %v2387 = vpop.f32.mrb[0].mxu0
        %2388 = vmatprep.mubr.bf16.mxu0 0
        %2389 = vmatmul.mubr.bf16.gmra.mrb[0].mxu0 %v1594
        %v2390 = vpop.f32.mrb[0].mxu0
        %v2391 = vadd.f32 %v2294, %v2390
        %v2392 = vpop.f32.mrb[0].mxu0
        %v2393 = vpop.f32.mrb[0].mxu0
        %v2394 = vadd.f32 %v2297, %v2393
        %v2395 = vpop.f32.mrb[0].mxu0
        %2396 = vmatprep.mubr.bf16.mxu0 0
        %2397 = vmatmul.mubr.bf16.gmra.mrb[0].mxu0 %v2016
        %v2398 = vpop.f32.mrb[0].mxu0
        %v2399 = vadd.f32 %v2302, %v2398
        %v2400 = vpop.f32.mrb[0].mxu0
        %v2401 = vpop.f32.mrb[0].mxu0
        %v2402 = vadd.f32 %v2305, %v2401
        %v2403 = vpop.f32.mrb[0].mxu0
        %2404 = vdwg.mxu0
        %v2405 = vadd.f32 %v1983, %v2343
        %v2406 = vadd.f32 %v1984, %v2346
        %v2407 = vadd.f32 %v1985, %v2351
        %v2408 = vadd.f32 %v1986, %v2354
        %v2409 = vadd.f32 %v1987, %v2359
        %v2410 = vadd.f32 %v1988, %v2362
        %v2411 = vadd.f32 %v1989, %v2367
        %v2412 = vadd.f32 %v1990, %v2370
        %v2413 = vadd.f32 %v1991, %v2375
        %v2414 = vadd.f32 %v1992, %v2378
        %v2415 = vadd.f32 %v1993, %v2383
        %v2416 = vadd.f32 %v1994, %v2386
        %v2417 = vadd.f32 %v1995, %v2391
        %v2418 = vadd.f32 %v1996, %v2394
        %v2419 = vadd.f32 %v1997, %v2399
        %v2420 = vadd.f32 %v1998, %v2402
        %v2421 = vmax.f32 %v2405, 0.0
        %v2422 = vmax.f32 %v2406, 0.0
        %v2423 = vmax.f32 %v2407, 0.0
        %v2424 = vmax.f32 %v2408, 0.0
        %v2425 = vmax.f32 %v2409, 0.0
        %v2426 = vmax.f32 %v2410, 0.0
        %v2427 = vmax.f32 %v2411, 0.0
        %v2428 = vmax.f32 %v2412, 0.0
        %v2429 = vmax.f32 %v2413, 0.0
        %v2430 = vmax.f32 %v2414, 0.0
        %v2431 = vmax.f32 %v2415, 0.0
        %v2432 = vmax.f32 %v2416, 0.0
        %v2433 = vmax.f32 %v2417, 0.0
        %v2434 = vmax.f32 %v2418, 0.0
        %v2435 = vmax.f32 %v2419, 0.0
        %v2436 = vmax.f32 %v2420, 0.0
        %v2437 = vpack.c.bf16 %v2422, %v2421
        %v2438 = vpack.c.bf16 %v2424, %v2423
        %v2439 = vpack.c.bf16 %v2426, %v2425
        %v2440 = vpack.c.bf16 %v2428, %v2427
        %v2441 = vpack.c.bf16 %v2430, %v2429
        %v2442 = vpack.c.bf16 %v2432, %v2431
        %v2443 = vpack.c.bf16 %v2434, %v2433
        %v2444 = vpack.c.bf16 %v2436, %v2435
        %v2445 = vld [vmem:[%s6] sm:$0xf]
        %v2446 = vld [vmem:[%s6 + $0x4] sm:$0xf]
        %v2447 = vld [vmem:[%s6 + $0x8] sm:$0xf]
        %v2448 = vld [vmem:[%s6 + $0xc] sm:$0xf]
        %v2449 = vld [vmem:[%s6 + $0x10] sm:$0xf]
        %v2450 = vld [vmem:[%s6 + $0x14] sm:$0xf]
        %v2451 = vld [vmem:[%s6 + $0x18] sm:$0xf]
        %v2452 = vld [vmem:[%s6 + $0x1c] sm:$0xf]
        %v2453 = vld [vmem:[%s6 + $0x20] sm:$0xf]
        %v2454 = vld [vmem:[%s6 + $0x24] sm:$0xf]
        %v2455 = vld [vmem:[%s6 + $0x28] sm:$0xf]
        %v2456 = vld [vmem:[%s6 + $0x2c] sm:$0xf]
        %v2457 = vld [vmem:[%s6 + $0x30] sm:$0xf]
        %v2458 = vld [vmem:[%s6 + $0x34] sm:$0xf]
        %v2459 = vld [vmem:[%s6 + $0x38] sm:$0xf]
        %v2460 = vld [vmem:[%s6 + $0x3c] sm:$0xf]
        %v2461 = vld [vmem:[%s7] sm:$0x1]
        %v2463 = vlaneseq
        %v2464 = vshrl.u32 %v2463, 7
        %v2465 = vsub.s32 0, %v2464
        %v2466 = vrot.slane %v2461, %v2465
        %v2484 = vunpack.c.l.b16 %v2445
        %v2485 = vunpack.c.l.b16 %v2446
        %v2486 = vunpack.c.l.b16 %v2447
        %v2487 = vunpack.c.l.b16 %v2448
        %v2488 = vunpack.c.l.b16 %v2449
        %v2489 = vunpack.c.l.b16 %v2450
        %v2490 = vunpack.c.l.b16 %v2451
        %v2491 = vunpack.c.l.b16 %v2452
        %v2492 = vunpack.c.l.b16 %v2453
        %v2493 = vunpack.c.l.b16 %v2454
        %v2494 = vunpack.c.l.b16 %v2455
        %v2495 = vunpack.c.l.b16 %v2456
        %v2496 = vunpack.c.l.b16 %v2457
        %v2497 = vunpack.c.l.b16 %v2458
        %v2498 = vunpack.c.l.b16 %v2459
        %v2499 = vunpack.c.l.b16 %v2460
        %v2500 = vpack.c.b16 %v2485, %v2484
        %v2501 = vpack.c.b16 %v2487, %v2486
        %v2502 = vpack.c.b16 %v2489, %v2488
        %v2503 = vpack.c.b16 %v2491, %v2490
        %v2504 = vpack.c.b16 %v2493, %v2492
        %v2505 = vpack.c.b16 %v2495, %v2494
        %v2506 = vpack.c.b16 %v2497, %v2496
        %v2507 = vpack.c.b16 %v2499, %v2498
        %2516 = vmatprep.subr.bf16.mxu0 0
        %2517 = vmatpush1.bf16.msra.mxu0 %v2500
        %2518 = vmatprep.subr.bf16.mxu0 0
        %2519 = vmatpush1.bf16.msra.mxu0 %v2501
        %2520 = vmatprep.subr.bf16.mxu0 0
        %2521 = vmatpush1.bf16.msra.mxu0 %v2502
        %2522 = vmatprep.subr.bf16.mxu0 0
        %2523 = vmatpush1.bf16.msra.mxu0 %v2503
        %2524 = vmatprep.subr.bf16.mxu0 0
        %2525 = vmatpush1.bf16.msra.mxu0 %v2504
        %2526 = vmatprep.subr.bf16.mxu0 0
        %2527 = vmatpush1.bf16.msra.mxu0 %v2505
        %2528 = vmatprep.subr.bf16.mxu0 0
        %2529 = vmatpush1.bf16.msra.mxu0 %v2506
        %2530 = vmatprep.subr.bf16.mxu0 0
        %2531 = vmatpush1.bf16.msra.mxu0 %v2507
        %2532 = vmatprep.subr.bf16.mxu0 0
        %2533 = vmatpush1.bf16.msra.mxu0 0
        %2534 = vmatprep.subr.bf16.mxu0 0
        %2535 = vmatpush1.bf16.msra.mxu0 0
        %2536 = vmatprep.subr.bf16.mxu0 0
        %2537 = vmatpush1.bf16.msra.mxu0 0
        %2538 = vmatprep.subr.bf16.mxu0 0
        %2539 = vmatpush1.bf16.msra.mxu0 0
        %2540 = vmatprep.subr.bf16.mxu0 0
        %2541 = vmatpush1.bf16.msra.mxu0 0
        %2542 = vmatprep.subr.bf16.mxu0 0
        %2543 = vmatpush1.bf16.msra.mxu0 0
        %2544 = vmatprep.subr.bf16.mxu0 0
        %2545 = vmatpush1.bf16.msra.mxu0 0
        %2546 = vmatprep.subr.bf16.mxu0 0
        %2547 = vmatpush1.bf16.msra.mxu0 0
        %2548 = vmatprep.mubr.bf16.mxu0 0
        %2549 = vmatmul.mubr.bf16.gmra.mrb[0].mxu0 %v2437
        %v2550 = vpop.f32.mrb[0].mxu0
        %v2551 = vadd.f32 %v2466, %v2550
        %v2552 = vpop.f32.mrb[0].mxu0
        %v2553 = vpop.f32.mrb[0].mxu0
        %v2554 = vadd.f32 %v2466, %v2553
        %v2555 = vpop.f32.mrb[0].mxu0
        %2556 = vmatprep.mubr.bf16.mxu0 0
        %2557 = vmatmul.mubr.bf16.gmra.mrb[0].mxu0 %v2438
        %v2558 = vpop.f32.mrb[0].mxu0
        %v2559 = vadd.f32 %v2466, %v2558
        %v2560 = vpop.f32.mrb[0].mxu0
        %v2561 = vpop.f32.mrb[0].mxu0
        %v2562 = vadd.f32 %v2466, %v2561
        %v2563 = vpop.f32.mrb[0].mxu0
        %2564 = vmatprep.mubr.bf16.mxu0 0
        %2565 = vmatmul.mubr.bf16.gmra.mrb[0].mxu0 %v2439
        %v2566 = vpop.f32.mrb[0].mxu0
        %v2567 = vadd.f32 %v2466, %v2566
        %v2568 = vpop.f32.mrb[0].mxu0
        %v2569 = vpop.f32.mrb[0].mxu0
        %v2570 = vadd.f32 %v2466, %v2569
        %v2571 = vpop.f32.mrb[0].mxu0
        %2572 = vmatprep.mubr.bf16.mxu0 0
        %2573 = vmatmul.mubr.bf16.gmra.mrb[0].mxu0 %v2440
        %v2574 = vpop.f32.mrb[0].mxu0
        %v2575 = vadd.f32 %v2466, %v2574
        %v2576 = vpop.f32.mrb[0].mxu0
        %v2577 = vpop.f32.mrb[0].mxu0
        %v2578 = vadd.f32 %v2466, %v2577
        %v2579 = vpop.f32.mrb[0].mxu0
        %2580 = vmatprep.mubr.bf16.mxu0 0
        %2581 = vmatmul.mubr.bf16.gmra.mrb[0].mxu0 %v2441
        %v2582 = vpop.f32.mrb[0].mxu0
        %v2583 = vadd.f32 %v2466, %v2582
        %v2584 = vpop.f32.mrb[0].mxu0
        %v2585 = vpop.f32.mrb[0].mxu0
        %v2586 = vadd.f32 %v2466, %v2585
        %v2587 = vpop.f32.mrb[0].mxu0
        %2588 = vmatprep.mubr.bf16.mxu0 0
        %2589 = vmatmul.mubr.bf16.gmra.mrb[0].mxu0 %v2442
        %v2590 = vpop.f32.mrb[0].mxu0
        %v2591 = vadd.f32 %v2466, %v2590
        %v2592 = vpop.f32.mrb[0].mxu0
        %v2593 = vpop.f32.mrb[0].mxu0
        %v2594 = vadd.f32 %v2466, %v2593
        %v2595 = vpop.f32.mrb[0].mxu0
        %2596 = vmatprep.mubr.bf16.mxu0 0
        %2597 = vmatmul.mubr.bf16.gmra.mrb[0].mxu0 %v2443
        %v2598 = vpop.f32.mrb[0].mxu0
        %v2599 = vadd.f32 %v2466, %v2598
        %v2600 = vpop.f32.mrb[0].mxu0
        %v2601 = vpop.f32.mrb[0].mxu0
        %v2602 = vadd.f32 %v2466, %v2601
        %v2603 = vpop.f32.mrb[0].mxu0
        %2604 = vmatprep.mubr.bf16.mxu0 0
        %2605 = vmatmul.mubr.bf16.gmra.mrb[0].mxu0 %v2444
        %v2606 = vpop.f32.mrb[0].mxu0
        %v2607 = vadd.f32 %v2466, %v2606
        %v2608 = vpop.f32.mrb[0].mxu0
        %v2609 = vpop.f32.mrb[0].mxu0
        %v2610 = vadd.f32 %v2466, %v2609
        %v2611 = vpop.f32.mrb[0].mxu0
        %2612 = vdwg.mxu0
        %vm2613 = vsmask.f32 3328
        %vm2614 = vsmask.f32 7440
        %vm2615 = vmor %vm2613, %vm2614
        %v2617 = vshrl.u32 %v381, 16
        %v2619 = vrot.slane %v2617, 4
        %v2620 = vshll.u32 %v381, 16
        %v2622 = vrot.slane %v2620, 5
        %v2623 = vor.u32 %v2619, %v2622
        %v2624 = vrot.slane %v2623, 4
        %v2626 = vshll.u32 %v382, 16
        %v2628 = vrot.slane %v2626, 5
        %v2629 = vsel %vm2615, %v2624, %v2628
        %v2630 = vshrl.u32 %v382, 16
        %v2632 = vrot.slane %v2630, 4
        %v2633 = vor.u32 %v2632, %v2628
        %v2634 = vrot.slane %v2633, 4
        %v2636 = vshll.u32 %v383, 16
        %v2638 = vrot.slane %v2636, 5
        %v2639 = vsel %vm2615, %v2634, %v2638
        %v2641 = vshrl.u32 %v384, 16
        %v2643 = vrot.slane %v2641, 4
        %v2644 = vshll.u32 %v384, 16
        %v2646 = vrot.slane %v2644, 5
        %v2647 = vor.u32 %v2643, %v2646
        %v2648 = vrot.slane %v2647, 4
        %v2650 = vshll.u32 %v385, 16
        %v2652 = vrot.slane %v2650, 5
        %v2653 = vsel %vm2615, %v2648, %v2652
        %v2654 = vshrl.u32 %v385, 16
        %v2656 = vrot.slane %v2654, 4
        %v2657 = vor.u32 %v2656, %v2652
        %v2658 = vrot.slane %v2657, 4
        %v2660 = vshll.u32 %v386, 16
        %v2662 = vrot.slane %v2660, 5
        %v2663 = vsel %vm2615, %v2658, %v2662
        %v2665 = vshrl.u32 %v387, 16
        %v2667 = vrot.slane %v2665, 4
        %v2668 = vshll.u32 %v387, 16
        %v2670 = vrot.slane %v2668, 5
        %v2671 = vor.u32 %v2667, %v2670
        %v2672 = vrot.slane %v2671, 4
        %v2674 = vshll.u32 %v388, 16
        %v2676 = vrot.slane %v2674, 5
        %v2677 = vsel %vm2615, %v2672, %v2676
        %v2678 = vshrl.u32 %v388, 16
        %v2680 = vrot.slane %v2678, 4
        %v2681 = vor.u32 %v2680, %v2676
        %v2682 = vrot.slane %v2681, 4
        %v2684 = vshll.u32 %v389, 16
        %v2686 = vrot.slane %v2684, 5
        %v2687 = vsel %vm2615, %v2682, %v2686
        %v2689 = vshrl.u32 %v390, 16
        %v2691 = vrot.slane %v2689, 4
        %v2692 = vshll.u32 %v390, 16
        %v2694 = vrot.slane %v2692, 5
        %v2695 = vor.u32 %v2691, %v2694
        %v2696 = vrot.slane %v2695, 4
        %v2698 = vshll.u32 %v391, 16
        %v2700 = vrot.slane %v2698, 5
        %v2701 = vsel %vm2615, %v2696, %v2700
        %v2702 = vshrl.u32 %v391, 16
        %v2704 = vrot.slane %v2702, 4
        %v2705 = vor.u32 %v2704, %v2700
        %v2706 = vrot.slane %v2705, 4
        %v2708 = vshll.u32 %v392, 16
        %v2710 = vrot.slane %v2708, 5
        %v2711 = vsel %vm2615, %v2706, %v2710
        %v2713 = vshrl.u32 %v393, 16
        %v2715 = vrot.slane %v2713, 4
        %v2716 = vshll.u32 %v393, 16
        %v2718 = vrot.slane %v2716, 5
        %v2719 = vor.u32 %v2715, %v2718
        %v2720 = vrot.slane %v2719, 4
        %v2722 = vshll.u32 %v394, 16
        %v2724 = vrot.slane %v2722, 5
        %v2725 = vsel %vm2615, %v2720, %v2724
        %v2726 = vshrl.u32 %v394, 16
        %v2728 = vrot.slane %v2726, 4
        %v2729 = vor.u32 %v2728, %v2724
        %v2730 = vrot.slane %v2729, 4
        %v2732 = vshll.u32 %v395, 16
        %v2734 = vrot.slane %v2732, 5
        %v2735 = vsel %vm2615, %v2730, %v2734
        %v2737 = vshrl.u32 %v396, 16
        %v2739 = vrot.slane %v2737, 4
        %v2740 = vshll.u32 %v396, 16
        %v2742 = vrot.slane %v2740, 5
        %v2743 = vor.u32 %v2739, %v2742
        %v2744 = vrot.slane %v2743, 4
        %v2746 = vshll.u32 %v397, 16
        %v2748 = vrot.slane %v2746, 5
        %v2749 = vsel %vm2615, %v2744, %v2748
        %v2750 = vshrl.u32 %v397, 16
        %v2752 = vrot.slane %v2750, 4
        %v2753 = vor.u32 %v2752, %v2748
        %v2754 = vrot.slane %v2753, 4
        %v2756 = vshll.u32 %v398, 16
        %v2758 = vrot.slane %v2756, 5
        %v2759 = vsel %vm2615, %v2754, %v2758
        %v2761 = vshrl.u32 %v399, 16
        %v2763 = vrot.slane %v2761, 4
        %v2764 = vshll.u32 %v399, 16
        %v2766 = vrot.slane %v2764, 5
        %v2767 = vor.u32 %v2763, %v2766
        %v2768 = vrot.slane %v2767, 4
        %v2770 = vshll.u32 %v400, 16
        %v2772 = vrot.slane %v2770, 5
        %v2773 = vsel %vm2615, %v2768, %v2772
        %v2774 = vshrl.u32 %v400, 16
        %v2776 = vrot.slane %v2774, 4
        %v2777 = vor.u32 %v2776, %v2772
        %v2778 = vrot.slane %v2777, 4
        %v2780 = vshll.u32 %v401, 16
        %v2782 = vrot.slane %v2780, 5
        %v2783 = vsel %vm2615, %v2778, %v2782
        %v2785 = vshrl.u32 %v402, 16
        %v2787 = vrot.slane %v2785, 4
        %v2788 = vshll.u32 %v402, 16
        %v2790 = vrot.slane %v2788, 5
        %v2791 = vor.u32 %v2787, %v2790
        %v2792 = vrot.slane %v2791, 4
        %v2794 = vshll.u32 %v403, 16
        %v2796 = vrot.slane %v2794, 5
        %v2797 = vsel %vm2615, %v2792, %v2796
        %v2798 = vshrl.u32 %v403, 16
        %v2800 = vrot.slane %v2798, 4
        %v2801 = vor.u32 %v2800, %v2796
        %v2802 = vrot.slane %v2801, 4
        %v2804 = vshll.u32 %v404, 16
        %v2806 = vrot.slane %v2804, 5
        %v2807 = vsel %vm2615, %v2802, %v2806
        %v2808 = vld [vmem:[%s8] sm:$0xf]
        %v2809 = vld [vmem:[%s8 + $0x4] sm:$0xf]
        %v2810 = vld [vmem:[%s8 + $0x8] sm:$0xf]
        %v2811 = vld [vmem:[%s8 + $0xc] sm:$0xf]
        %v2812 = vld [vmem:[%s8 + $0x10] sm:$0xf]
        %v2813 = vld [vmem:[%s8 + $0x14] sm:$0xf]
        %v2814 = vld [vmem:[%s8 + $0x18] sm:$0xf]
        %v2815 = vld [vmem:[%s8 + $0x1c] sm:$0xf]
        %v2816 = vld [vmem:[%s8 + $0x20] sm:$0xf]
        %v2817 = vld [vmem:[%s8 + $0x24] sm:$0xf]
        %v2818 = vld [vmem:[%s8 + $0x28] sm:$0xf]
        %v2819 = vld [vmem:[%s8 + $0x2c] sm:$0xf]
        %v2820 = vld [vmem:[%s8 + $0x30] sm:$0xf]
        %v2821 = vld [vmem:[%s8 + $0x34] sm:$0xf]
        %v2822 = vld [vmem:[%s8 + $0x38] sm:$0xf]
        %v2823 = vld [vmem:[%s8 + $0x3c] sm:$0xf]
        %v2824 = vld [vmem:[%s9] sm:$0x1]
        %v2826 = vlaneseq
        %v2827 = vshrl.u32 %v2826, 7
        %v2828 = vsub.s32 0, %v2827
        %v2829 = vrot.slane %v2824, %v2828
        %v2831 = vunpack.c.l.b16 %v2629
        %v2832 = vunpack.c.l.b16 %v2639
        %v2833 = vunpack.c.l.b16 %v2653
        %v2834 = vunpack.c.l.b16 %v2663
        %v2835 = vunpack.c.l.b16 %v2677
        %v2836 = vunpack.c.l.b16 %v2687
        %v2837 = vunpack.c.l.b16 %v2701
        %v2838 = vunpack.c.l.b16 %v2711
        %v2839 = vunpack.c.l.b16 %v2725
        %v2840 = vunpack.c.l.b16 %v2735
        %v2841 = vunpack.c.l.b16 %v2749
        %v2842 = vunpack.c.l.b16 %v2759
        %v2843 = vunpack.c.l.b16 %v2773
        %v2844 = vunpack.c.l.b16 %v2783
        %v2845 = vunpack.c.l.b16 %v2797
        %v2846 = vunpack.c.l.b16 %v2807
        %v2847 = vpack.c.b16 %v2832, %v2831
        %v2848 = vpack.c.b16 %v2834, %v2833
        %v2849 = vpack.c.b16 %v2836, %v2835
        %v2850 = vpack.c.b16 %v2838, %v2837
        %v2851 = vpack.c.b16 %v2840, %v2839
        %v2852 = vpack.c.b16 %v2842, %v2841
        %v2853 = vpack.c.b16 %v2844, %v2843
        %v2854 = vpack.c.b16 %v2846, %v2845
        %v2879 = vunpack.c.l.b16 %v2808
        %v2880 = vunpack.c.l.b16 %v2809
        %v2881 = vunpack.c.l.b16 %v2810
        %v2882 = vunpack.c.l.b16 %v2811
        %v2883 = vunpack.c.l.b16 %v2812
        %v2884 = vunpack.c.l.b16 %v2813
        %v2885 = vunpack.c.l.b16 %v2814
        %v2886 = vunpack.c.l.b16 %v2815
        %v2887 = vunpack.c.l.b16 %v2816
        %v2888 = vunpack.c.l.b16 %v2817
        %v2889 = vunpack.c.l.b16 %v2818
        %v2890 = vunpack.c.l.b16 %v2819
        %v2891 = vunpack.c.l.b16 %v2820
        %v2892 = vunpack.c.l.b16 %v2821
        %v2893 = vunpack.c.l.b16 %v2822
        %v2894 = vunpack.c.l.b16 %v2823
        %v2895 = vpack.c.b16 %v2880, %v2879
        %v2896 = vpack.c.b16 %v2882, %v2881
        %v2897 = vpack.c.b16 %v2884, %v2883
        %v2898 = vpack.c.b16 %v2886, %v2885
        %v2899 = vpack.c.b16 %v2888, %v2887
        %v2900 = vpack.c.b16 %v2890, %v2889
        %v2901 = vpack.c.b16 %v2892, %v2891
        %v2902 = vpack.c.b16 %v2894, %v2893
        %2911 = vmatprep.subr.bf16.mxu0 0
        %2912 = vmatpush1.bf16.msra.mxu0 %v2895
        %2913 = vmatprep.subr.bf16.mxu0 0
        %2914 = vmatpush1.bf16.msra.mxu0 %v2896
        %2915 = vmatprep.subr.bf16.mxu0 0
        %2916 = vmatpush1.bf16.msra.mxu0 %v2897
        %2917 = vmatprep.subr.bf16.mxu0 0
        %2918 = vmatpush1.bf16.msra.mxu0 %v2898
        %2919 = vmatprep.subr.bf16.mxu0 0
        %2920 = vmatpush1.bf16.msra.mxu0 %v2899
        %2921 = vmatprep.subr.bf16.mxu0 0
        %2922 = vmatpush1.bf16.msra.mxu0 %v2900
        %2923 = vmatprep.subr.bf16.mxu0 0
        %2924 = vmatpush1.bf16.msra.mxu0 %v2901
        %2925 = vmatprep.subr.bf16.mxu0 0
        %2926 = vmatpush1.bf16.msra.mxu0 %v2902
        %2927 = vmatprep.subr.bf16.mxu0 0
        %2928 = vmatpush1.bf16.msra.mxu0 0
        %2929 = vmatprep.subr.bf16.mxu0 0
        %2930 = vmatpush1.bf16.msra.mxu0 0
        %2931 = vmatprep.subr.bf16.mxu0 0
        %2932 = vmatpush1.bf16.msra.mxu0 0
        %2933 = vmatprep.subr.bf16.mxu0 0
        %2934 = vmatpush1.bf16.msra.mxu0 0
        %2935 = vmatprep.subr.bf16.mxu0 0
        %2936 = vmatpush1.bf16.msra.mxu0 0
        %2937 = vmatprep.subr.bf16.mxu0 0
        %2938 = vmatpush1.bf16.msra.mxu0 0
        %2939 = vmatprep.subr.bf16.mxu0 0
        %2940 = vmatpush1.bf16.msra.mxu0 0
        %2941 = vmatprep.subr.bf16.mxu0 0
        %2942 = vmatpush1.bf16.msra.mxu0 0
        %2943 = vmatprep.mubr.bf16.mxu0 0
        %2944 = vmatmul.mubr.bf16.gmra.mrb[0].mxu0 %v2847
        %v2945 = vpop.f32.mrb[0].mxu0
        %v2946 = vadd.f32 %v2829, %v2945
        %v2947 = vpop.f32.mrb[0].mxu0
        %v2948 = vpop.f32.mrb[0].mxu0
        %v2949 = vadd.f32 %v2829, %v2948
        %v2950 = vpop.f32.mrb[0].mxu0
        %2951 = vmatprep.mubr.bf16.mxu0 0
        %2952 = vmatmul.mubr.bf16.gmra.mrb[0].mxu0 %v2848
        %v2953 = vpop.f32.mrb[0].mxu0
        %v2954 = vadd.f32 %v2829, %v2953
        %v2955 = vpop.f32.mrb[0].mxu0
        %v2956 = vpop.f32.mrb[0].mxu0
        %v2957 = vadd.f32 %v2829, %v2956
        %v2958 = vpop.f32.mrb[0].mxu0
        %2959 = vmatprep.mubr.bf16.mxu0 0
        %2960 = vmatmul.mubr.bf16.gmra.mrb[0].mxu0 %v2849
        %v2961 = vpop.f32.mrb[0].mxu0
        %v2962 = vadd.f32 %v2829, %v2961
        %v2963 = vpop.f32.mrb[0].mxu0
        %v2964 = vpop.f32.mrb[0].mxu0
        %v2965 = vadd.f32 %v2829, %v2964
        %v2966 = vpop.f32.mrb[0].mxu0
        %2967 = vmatprep.mubr.bf16.mxu0 0
        %2968 = vmatmul.mubr.bf16.gmra.mrb[0].mxu0 %v2850
        %v2969 = vpop.f32.mrb[0].mxu0
        %v2970 = vadd.f32 %v2829, %v2969
        %v2971 = vpop.f32.mrb[0].mxu0
        %v2972 = vpop.f32.mrb[0].mxu0
        %v2973 = vadd.f32 %v2829, %v2972
        %v2974 = vpop.f32.mrb[0].mxu0
        %2975 = vmatprep.mubr.bf16.mxu0 0
        %2976 = vmatmul.mubr.bf16.gmra.mrb[0].mxu0 %v2851
        %v2977 = vpop.f32.mrb[0].mxu0
        %v2978 = vadd.f32 %v2829, %v2977
        %v2979 = vpop.f32.mrb[0].mxu0
        %v2980 = vpop.f32.mrb[0].mxu0
        %v2981 = vadd.f32 %v2829, %v2980
        %v2982 = vpop.f32.mrb[0].mxu0
        %2983 = vmatprep.mubr.bf16.mxu0 0
        %2984 = vmatmul.mubr.bf16.gmra.mrb[0].mxu0 %v2852
        %v2985 = vpop.f32.mrb[0].mxu0
        %v2986 = vadd.f32 %v2829, %v2985
        %v2987 = vpop.f32.mrb[0].mxu0
        %v2988 = vpop.f32.mrb[0].mxu0
        %v2989 = vadd.f32 %v2829, %v2988
        %v2990 = vpop.f32.mrb[0].mxu0
        %2991 = vmatprep.mubr.bf16.mxu0 0
        %2992 = vmatmul.mubr.bf16.gmra.mrb[0].mxu0 %v2853
        %v2993 = vpop.f32.mrb[0].mxu0
        %v2994 = vadd.f32 %v2829, %v2993
        %v2995 = vpop.f32.mrb[0].mxu0
        %v2996 = vpop.f32.mrb[0].mxu0
        %v2997 = vadd.f32 %v2829, %v2996
        %v2998 = vpop.f32.mrb[0].mxu0
        %2999 = vmatprep.mubr.bf16.mxu0 0
        %3000 = vmatmul.mubr.bf16.gmra.mrb[0].mxu0 %v2854
        %v3001 = vpop.f32.mrb[0].mxu0
        %v3002 = vadd.f32 %v2829, %v3001
        %v3003 = vpop.f32.mrb[0].mxu0
        %v3004 = vpop.f32.mrb[0].mxu0
        %v3005 = vadd.f32 %v2829, %v3004
        %v3006 = vpop.f32.mrb[0].mxu0
        %3007 = vdwg.mxu0
        %v3008 = vadd.f32 %v2551, %v2946
        %v3009 = vadd.f32 %v2554, %v2949
        %v3010 = vadd.f32 %v2559, %v2954
        %v3011 = vadd.f32 %v2562, %v2957
        %v3012 = vadd.f32 %v2567, %v2962
        %v3013 = vadd.f32 %v2570, %v2965
        %v3014 = vadd.f32 %v2575, %v2970
        %v3015 = vadd.f32 %v2578, %v2973
        %v3016 = vadd.f32 %v2583, %v2978
        %v3017 = vadd.f32 %v2586, %v2981
        %v3018 = vadd.f32 %v2591, %v2986
        %v3019 = vadd.f32 %v2594, %v2989
        %v3020 = vadd.f32 %v2599, %v2994
        %v3021 = vadd.f32 %v2602, %v2997
        %v3022 = vadd.f32 %v2607, %v3002
        %v3023 = vadd.f32 %v2610, %v3005
        %v3024 = vmax.f32 %v3008, 0.0
        %v3025 = vmax.f32 %v3009, 0.0
        %v3026 = vmax.f32 %v3010, 0.0
        %v3027 = vmax.f32 %v3011, 0.0
        %v3028 = vmax.f32 %v3012, 0.0
        %v3029 = vmax.f32 %v3013, 0.0
        %v3030 = vmax.f32 %v3014, 0.0
        %v3031 = vmax.f32 %v3015, 0.0
        %v3032 = vmax.f32 %v3016, 0.0
        %v3033 = vmax.f32 %v3017, 0.0
        %v3034 = vmax.f32 %v3018, 0.0
        %v3035 = vmax.f32 %v3019, 0.0
        %v3036 = vmax.f32 %v3020, 0.0
        %v3037 = vmax.f32 %v3021, 0.0
        %v3038 = vmax.f32 %v3022, 0.0
        %v3039 = vmax.f32 %v3023, 0.0
        %3040 = vst [vmem:[%s366] sm:$0xff] %v3024
        %3041 = vst [vmem:[%s366 + $0x8] sm:$0xff] %v3025
        %3042 = vst [vmem:[%s366 + $0x10] sm:$0xff] %v3026
        %3043 = vst [vmem:[%s366 + $0x18] sm:$0xff] %v3027
        %3044 = vst [vmem:[%s366 + $0x20] sm:$0xff] %v3028
        %3045 = vst [vmem:[%s366 + $0x28] sm:$0xff] %v3029
        %3046 = vst [vmem:[%s366 + $0x30] sm:$0xff] %v3030
        %3047 = vst [vmem:[%s366 + $0x38] sm:$0xff] %v3031
        %3048 = vst [vmem:[%s366 + $0x40] sm:$0xff] %v3032
        %3049 = vst [vmem:[%s366 + $0x48] sm:$0xff] %v3033
        %3050 = vst [vmem:[%s366 + $0x50] sm:$0xff] %v3034
        %3051 = vst [vmem:[%s366 + $0x58] sm:$0xff] %v3035
        %3052 = vst [vmem:[%s366 + $0x60] sm:$0xff] %v3036
        %3053 = vst [vmem:[%s366 + $0x68] sm:$0xff] %v3037
        %3054 = vst [vmem:[%s366 + $0x70] sm:$0xff] %v3038
        %3055 = vst [vmem:[%s366 + $0x78] sm:$0xff] %v3039
        %s3056 = sand.u32 %s261, 1
        %s3057 = scalar_lea.sflag [#allocation3], %s3056
        %s3058 = sand.u32 %s261, 1
        %s3059 = smul.addr %s3058, 128
        %s3060 = scalar_lea.vmem [#allocation2], %s3059
        // Predicated region
        $region61: #{bottleneck_forward_nhwc.1} parent=59 // pred_check
          %p3061 = pneg %p271
        $region62: #{bottleneck_forward_nhwc.1} parent=59 // pred_check_branch
          %3063 = sbr.rel (%p3061) target = $region64
        $region63: #{bottleneck_forward_nhwc.1} parent=59 // pred_region
          %s3064 = smul.u32 8, %s29
          %s3066 = ssub.s32 2048, 2048
          %3067 = vsyncadd %s3057, %s3066
          %s3068 = smul.addr %s3064, 2
          %s3069 = smul.addr %s28, 32
          %s3070 = sadd.s32 %s3068, %s3069
          %s3071 = smul.addr %s3070, 128
          %s3072 = scalar_lea.hbm %s10, %s3071
          %s3073 = sshll.u32 %s3060, 4
          %s3074 = int_to_ptr.vmem [resolvable:$true] %s3073
          %3079 = dma.vmem_to_hbm [thread:$0]  %s3074, 2048, %s3072, %s3057, 128, 128, 8
        $region64: #{bottleneck_forward_nhwc.1} parent=59 // pred_fallthru
          _
      $region60: #{bottleneck_forward_nhwc.1} parent=5 // pred_fallthru
        _
      %p3080 = scmp.le.s32.totalorder 2, %s19
      // Predicated region
      $region65: #{bottleneck_forward_nhwc.1} parent=5 // pred_check
        %p3081 = pneg %p3080
      $region66: #{bottleneck_forward_nhwc.1} parent=5 // pred_check_branch
        %3083 = sbr.rel (%p3081) target = $region68
      $region67: #{bottleneck_forward_nhwc.1} parent=5 // pred_region
        %s3084 = ssub.s32 %s19, 2
        // Predicated region
        $region69: #{bottleneck_forward_nhwc.1} parent=67 // pred_check
          %p3085 = pneg %p277
        $region70: #{bottleneck_forward_nhwc.1} parent=67 // pred_check_branch
          %3087 = sbr.rel (%p3085) target = $region72
        $region71: #{bottleneck_forward_nhwc.1} parent=67 // pred_region
          %s3088 = sand.u32 %s262, 1
          %s3089 = scalar_lea.sflag [#allocation3], %s3088
          %s3090 = sand.u32 %s262, 1
          %s3091 = smul.addr %s3090, 128
          %s3092 = scalar_lea.vmem [#allocation2], %s3091
          %3093 = dma.done %s3089, 2048
        $region72: #{bottleneck_forward_nhwc.1} parent=67 // pred_fallthru
          _
      $region68: #{bottleneck_forward_nhwc.1} parent=5 // pred_fallthru
        _
    $region6: #{bottleneck_forward_nhwc.1} parent=1 // loop_footer
      %s23 = sadd.s32 1, %s19
    $region7: #{bottleneck_forward_nhwc.1} parent=1 // loop_footer_branch
      %18 = sbr.rel target = $region3
    $region8: #{bottleneck_forward_nhwc.1} parent=1 // loop_exit
      _
    %3094 = vsyncpa [#allocation3], 1
    %s3095 = scalar_lea.sflag [#allocation3], 1
    %3096 = vsyncpa %s3095, 1

</llo_original>
